<compile_context>
chip_gen: v7x
topology: tpu7x:2x2x1
jax: 0.10.0
libtpu: 0.0.40
codegen_flags: <defaults>
</compile_context>

<pallas_src>
import math

import jax
import jax.numpy as jnp
from jax.experimental import pallas as pl
from jax.experimental.pallas import tpu as pltpu

_MM_DTYPE = jnp.bfloat16  # MXU-native matmul input dtype on v5e/v6e/v7x
_VMEM_SPEC = pl.BlockSpec(memory_space=pltpu.MemorySpace.VMEM)

# Per-layer weight ordering (must match between wrapper flattening and kernel).
_LAYER0_KEYS = ("wx_r", "wx_z", "wx_n", "wc_r", "wc_z", "wc_n",
                "wh_r", "wh_z", "wh_n", "b_r", "b_z", "bi_n", "bh_n")
_LAYERK_KEYS = ("wi_r", "wi_z", "wi_n",
                "wh_r", "wh_z", "wh_n", "b_r", "b_z", "bi_n", "bh_n")
_OUT_KEYS = ("wo_x", "wo_c", "wo_h", "b")


# ------------------------------ Fused kernel -------------------------------

def _make_decoder_step_kernel(nlayers):
    """Build the fused decoder-step kernel for a static number of layers."""

    def kernel(*refs):
        it = iter(refs)
        inputs_ref = next(it)    # (B, ninp)           f32
        context_ref = next(it)   # (B, H)              f32
        hidden_ref = next(it)    # (nlayers, B, H)     f32

        layer_w = []
        for layer in range(nlayers):
            keys = _LAYER0_KEYS if layer == 0 else _LAYERK_KEYS
            layer_w.append({k: next(it) for k in keys})
        out_w = {k: next(it) for k in _OUT_KEYS}

        pred_ref = next(it)      # (B, nout)           f32   [output]
        h_new_ref = next(it)     # (nlayers, B, H)     f32   [output, aliased]

        def mm(a, w_ref):
            # bf16 x bf16 -> f32 accumulation on the MXU.
            return jnp.dot(a, w_ref[...], preferred_element_type=jnp.float32)

        x_mm = inputs_ref[...].astype(_MM_DTYPE)
        c_mm = context_ref[...].astype(_MM_DTYPE)

        layer_in_mm = None  # bf16 activation fed to the next layer
        for layer in range(nlayers):
            w = layer_w[layer]
            h_prev = hidden_ref[layer]            # (B, H) f32
            h_mm = h_prev.astype(_MM_DTYPE)

            if layer == 0:
                # Split matmul replaces concat([inputs, context]).
                gi_r = mm(x_mm, w["wx_r"]) + mm(c_mm, w["wc_r"])
                gi_z = mm(x_mm, w["wx_z"]) + mm(c_mm, w["wc_z"])
                gi_n = mm(x_mm, w["wx_n"]) + mm(c_mm, w["wc_n"])
            else:
                gi_r = mm(layer_in_mm, w["wi_r"])
                gi_z = mm(layer_in_mm, w["wi_z"])
                gi_n = mm(layer_in_mm, w["wi_n"])

            gh_r = mm(h_mm, w["wh_r"])
            gh_z = mm(h_mm, w["wh_z"])
            gh_n = mm(h_mm, w["wh_n"])

            # Gate math in f32 (VPU/EUP); PyTorch GRU equations, order [r,z,n].
            r = jax.nn.sigmoid(gi_r + gh_r + w["b_r"][...])
            z = jax.nn.sigmoid(gi_z + gh_z + w["b_z"][...])
            n = jnp.tanh(gi_n + w["bi_n"][...] + r * (gh_n + w["bh_n"][...]))
            h_new = (1.0 - z) * n + z * h_prev

            h_new_ref[layer] = h_new
            # dropout=0 between layers (module default / eval semantics).
            layer_in_mm = h_new.astype(_MM_DTYPE)

        # Output projection with split matmul (no concat([x, output])).
        pred = (mm(x_mm, out_w["wo_x"])
                + mm(c_mm, out_w["wo_c"])
                + mm(layer_in_mm, out_w["wo_h"])
                + out_w["b"][...])
        pred_ref[...] = pred

    return kernel


# ----------------------------- Parameter init ------------------------------

def init_decoder_rnn_params(key, ninp, nhid, nout, nlayers,
                            weight_dtype=_MM_DTYPE):
    """PyTorch-style init, then re-layout for the fused kernel:
       per-gate transposed weight blocks, layer-0 input weights split into the
       `inputs` / `context` halves, r/z biases pre-folded. Biases stay f32."""
    H = nhid
    params = {"layers": [], "out": None}
    k = 1.0 / math.sqrt(nhid)
    for layer in range(nlayers):
        in_dim = (ninp + nhid) if layer == 0 else nhid
        key, k1, k2, k3, k4 = jax.random.split(key, 5)
        wih = jax.random.uniform(k1, (3 * H, in_dim), jnp.float32, -k, k)
        whh = jax.random.uniform(k2, (3 * H, H), jnp.float32, -k, k)
        bih = jax.random.uniform(k3, (3 * H,), jnp.float32, -k, k)
        bhh = jax.random.uniform(k4, (3 * H,), jnp.float32, -k, k)

        wih_t = wih.T                       # (in_dim, 3H), gate cols [r|z|n]
        whh_t = whh.T                       # (H, 3H)
        wi_r, wi_z, wi_n = wih_t[:, 0:H], wih_t[:, H:2 * H], wih_t[:, 2 * H:3 * H]
        wh_r, wh_z, wh_n = whh_t[:, 0:H], whh_t[:, H:2 * H], whh_t[:, 2 * H:3 * H]

        lp = {}
        if layer == 0:
            lp.update(
                wx_r=wi_r[:ninp].astype(weight_dtype),
                wx_z=wi_z[:ninp].astype(weight_dtype),
                wx_n=wi_n[:ninp].astype(weight_dtype),
                wc_r=wi_r[ninp:].astype(weight_dtype),
                wc_z=wi_z[ninp:].astype(weight_dtype),
                wc_n=wi_n[ninp:].astype(weight_dtype),
            )
        else:
            lp.update(
                wi_r=wi_r.astype(weight_dtype),
                wi_z=wi_z.astype(weight_dtype),
                wi_n=wi_n.astype(weight_dtype),
            )
        lp.update(
            wh_r=wh_r.astype(weight_dtype),
            wh_z=wh_z.astype(weight_dtype),
            wh_n=wh_n.astype(weight_dtype),
            b_r=(bih[0:H] + bhh[0:H]).reshape(1, H),           # folded, f32
            b_z=(bih[H:2 * H] + bhh[H:2 * H]).reshape(1, H),   # folded, f32
            bi_n=bih[2 * H:3 * H].reshape(1, H),               # f32
            bh_n=bhh[2 * H:3 * H].reshape(1, H),               # f32 (mult by r)
        )
        params["layers"].append(lp)

    out_in = ninp + 2 * nhid
    ko = 1.0 / math.sqrt(out_in)
    key, k1, k2 = jax.random.split(key, 3)
    w_out = jax.random.uniform(k1, (nout, out_in), jnp.float32, -ko, ko)
    b_out = jax.random.uniform(k2, (nout,), jnp.float32, -ko, ko)
    w_out_t = w_out.T                      # rows ordered [inputs|context|gru_out]
    params["out"] = dict(
        wo_x=w_out_t[:ninp].astype(weight_dtype),
        wo_c=w_out_t[ninp:ninp + nhid].astype(weight_dtype),
        wo_h=w_out_t[ninp + nhid:].astype(weight_dtype),
        b=b_out.reshape(1, nout),          # f32
    )
    return params


# ----------------------------- Forward wrapper -----------------------------

def decoder_rnn_forward(params, inputs, hidden, context):
    """inputs (B, ninp); hidden (nlayers, B, nhid); context (B, nhid)."""
    layers = params["layers"]
    nlayers = len(layers)
    B = inputs.shape[0]
    nhid = hidden.shape[-1]
    nout = params["out"]["wo_x"].shape[-1]

    flat_weights = []
    for layer, p in enumerate(layers):
        keys = _LAYER0_KEYS if layer == 0 else _LAYERK_KEYS
        flat_weights.extend(p[kname] for kname in keys)
    flat_weights.extend(params["out"][kname] for kname in _OUT_KEYS)

    n_in = 3 + len(flat_weights)
    pred, h_n = pl.pallas_call(
        _make_decoder_step_kernel(nlayers),
        out_shape=(
            jax.ShapeDtypeStruct((B, nout), jnp.float32),
            jax.ShapeDtypeStruct((nlayers, B, nhid), jnp.float32),
        ),
        in_specs=[_VMEM_SPEC] * n_in,
        out_specs=(_VMEM_SPEC, _VMEM_SPEC),
        # In-place hidden update: reuse the incoming hidden HBM buffer for the
        # new-hidden output (input index 2 -> output index 1).
        input_output_aliases={2: 1},
    )(inputs, context, hidden, *flat_weights)
    return pred, h_n


# TODO(synk): cross-decode-step weight residency / double-buffered weight
# streaming (P10/P4) is not implemented; irrelevant at these toy shapes.


# ------------------------- Pure-JAX reference check ------------------------

def _decoder_rnn_reference(params, inputs, hidden, context):
    """Same math as the kernel (same bf16 matmul path), in plain jnp."""
    def mm(a, w):
        return jnp.dot(a, w, preferred_element_type=jnp.float32)

    x = inputs.astype(_MM_DTYPE)
    c = context.astype(_MM_DTYPE)
    layer_in = None
    new_h = []
    for layer, p in enumerate(params["layers"]):
        h_prev = hidden[layer]
        h = h_prev.astype(_MM_DTYPE)
        if layer == 0:
            gi_r = mm(x, p["wx_r"]) + mm(c, p["wc_r"])
            gi_z = mm(x, p["wx_z"]) + mm(c, p["wc_z"])
            gi_n = mm(x, p["wx_n"]) + mm(c, p["wc_n"])
        else:
            li = layer_in.astype(_MM_DTYPE)
            gi_r, gi_z, gi_n = mm(li, p["wi_r"]), mm(li, p["wi_z"]), mm(li, p["wi_n"])
        gh_r, gh_z, gh_n = mm(h, p["wh_r"]), mm(h, p["wh_z"]), mm(h, p["wh_n"])
        r = jax.nn.sigmoid(gi_r + gh_r + p["b_r"])
        z = jax.nn.sigmoid(gi_z + gh_z + p["b_z"])
        n = jnp.tanh(gi_n + p["bi_n"] + r * (gh_n + p["bh_n"]))
        h_new = (1.0 - z) * n + z * h_prev
        new_h.append(h_new)
        layer_in = h_new
    o = params["out"]
    pred = (mm(x, o["wo_x"]) + mm(c, o["wo_c"])
            + mm(layer_in.astype(_MM_DTYPE), o["wo_h"]) + o["b"])
    return pred, jnp.stack(new_h, axis=0)


# ---------------------------------- Main -----------------------------------

if __name__ == "__main__":
    B, NINP, NHID, NOUT, NLAYERS = 2, 4, 32, 8, 2

    key = jax.random.PRNGKey(0)
    kp, ki, kh, kc = jax.random.split(key, 4)

    params = init_decoder_rnn_params(kp, NINP, NHID, NOUT, NLAYERS)

    inputs = jax.random.normal(ki, (B, NINP), jnp.float32)
    hidden = jax.random.normal(kh, (NLAYERS, B, NHID), jnp.float32)
    context = jax.random.normal(kc, (B, NHID), jnp.float32)

    step = jax.jit(decoder_rnn_forward)
    pred, h_n = step(params, inputs, hidden, context)
    jax.block_until_ready((pred, h_n))

    assert pred.shape == (B, NOUT)
    assert h_n.shape == (NLAYERS, B, NHID)

    # Numerical sanity check against a plain-JAX implementation of the same math.
    pred_ref, h_ref = _decoder_rnn_reference(params, inputs, hidden, context)
    assert jnp.allclose(pred, pred_ref, rtol=2e-2, atol=2e-2), "pred mismatch"
    assert jnp.allclose(h_n, h_ref, rtol=2e-2, atol=2e-2), "hidden mismatch"

    print("KERNEL_OK")
</pallas_src>

<mosaic_0001>
module attributes {stable_mosaic.version = 11 : i64} {
  func.func @kernel(%arg0: memref<2x4xf32, #tpu.memory_space<vmem>>, %arg1: memref<2x32xf32, #tpu.memory_space<vmem>>, %arg2: memref<2x2x32xf32, #tpu.memory_space<vmem>>, %arg3: memref<4x32xbf16, #tpu.memory_space<vmem>>, %arg4: memref<4x32xbf16, #tpu.memory_space<vmem>>, %arg5: memref<4x32xbf16, #tpu.memory_space<vmem>>, %arg6: memref<32x32xbf16, #tpu.memory_space<vmem>>, %arg7: memref<32x32xbf16, #tpu.memory_space<vmem>>, %arg8: memref<32x32xbf16, #tpu.memory_space<vmem>>, %arg9: memref<32x32xbf16, #tpu.memory_space<vmem>>, %arg10: memref<32x32xbf16, #tpu.memory_space<vmem>>, %arg11: memref<32x32xbf16, #tpu.memory_space<vmem>>, %arg12: memref<1x32xf32, #tpu.memory_space<vmem>>, %arg13: memref<1x32xf32, #tpu.memory_space<vmem>>, %arg14: memref<1x32xf32, #tpu.memory_space<vmem>>, %arg15: memref<1x32xf32, #tpu.memory_space<vmem>>, %arg16: memref<32x32xbf16, #tpu.memory_space<vmem>>, %arg17: memref<32x32xbf16, #tpu.memory_space<vmem>>, %arg18: memref<32x32xbf16, #tpu.memory_space<vmem>>, %arg19: memref<32x32xbf16, #tpu.memory_space<vmem>>, %arg20: memref<32x32xbf16, #tpu.memory_space<vmem>>, %arg21: memref<32x32xbf16, #tpu.memory_space<vmem>>, %arg22: memref<1x32xf32, #tpu.memory_space<vmem>>, %arg23: memref<1x32xf32, #tpu.memory_space<vmem>>, %arg24: memref<1x32xf32, #tpu.memory_space<vmem>>, %arg25: memref<1x32xf32, #tpu.memory_space<vmem>>, %arg26: memref<4x8xbf16, #tpu.memory_space<vmem>>, %arg27: memref<32x8xbf16, #tpu.memory_space<vmem>>, %arg28: memref<32x8xbf16, #tpu.memory_space<vmem>>, %arg29: memref<1x8xf32, #tpu.memory_space<vmem>>, %arg30: memref<2x8xf32, #tpu.memory_space<vmem>>, %arg31: memref<2x2x32xf32, #tpu.memory_space<vmem>>) attributes {dimension_semantics = [], scalar_prefetch = 0 : i64, scratch_operands = 0 : i64, tpu.core_type = #tpu.core_type<tc>} {
    %c0 = arith.constant 0 : index
    %c0_0 = arith.constant 0 : index
    %0 = vector.load %arg0[%c0, %c0_0] : memref<2x4xf32, #tpu.memory_space<vmem>>, vector<2x4xf32>
    %1 = arith.truncf %0 : vector<2x4xf32> to vector<2x4xbf16>
    %c0_1 = arith.constant 0 : index
    %c0_2 = arith.constant 0 : index
    %2 = vector.load %arg1[%c0_1, %c0_2] : memref<2x32xf32, #tpu.memory_space<vmem>>, vector<2x32xf32>
    %3 = arith.truncf %2 : vector<2x32xf32> to vector<2x32xbf16>
    %c0_3 = arith.constant 0 : index
    %c0_4 = arith.constant 0 : index
    %c0_5 = arith.constant 0 : index
    %4 = vector.load %arg2[%c0_3, %c0_4, %c0_5] : memref<2x2x32xf32, #tpu.memory_space<vmem>>, vector<1x2x32xf32>
    %5 = vector.shape_cast %4 : vector<1x2x32xf32> to vector<2x32xf32>
    %6 = arith.truncf %5 : vector<2x32xf32> to vector<2x32xbf16>
    %c0_6 = arith.constant 0 : index
    %c0_7 = arith.constant 0 : index
    %7 = vector.load %arg3[%c0_6, %c0_7] : memref<4x32xbf16, #tpu.memory_space<vmem>>, vector<4x32xbf16>
    %cst = arith.constant dense<0.000000e+00> : vector<2x32xf32>
    %8 = tpu.matmul %1, %7, %cst {dimension_numbers = #tpu.dot_dimension_numbers<[1], [0], [0], [1], [0, 0, 1, 1], [], []>} : vector<2x4xbf16>, vector<4x32xbf16>, vector<2x32xf32> -> vector<2x32xf32>
    %c0_8 = arith.constant 0 : index
    %c0_9 = arith.constant 0 : index
    %9 = vector.load %arg6[%c0_8, %c0_9] : memref<32x32xbf16, #tpu.memory_space<vmem>>, vector<32x32xbf16>
    %cst_10 = arith.constant dense<0.000000e+00> : vector<2x32xf32>
    %10 = tpu.matmul %3, %9, %cst_10 {dimension_numbers = #tpu.dot_dimension_numbers<[1], [0], [0], [1], [0, 0, 1, 1], [], []>} : vector<2x32xbf16>, vector<32x32xbf16>, vector<2x32xf32> -> vector<2x32xf32>
    %11 = arith.addf %8, %10 : vector<2x32xf32>
    %c0_11 = arith.constant 0 : index
    %c0_12 = arith.constant 0 : index
    %12 = vector.load %arg4[%c0_11, %c0_12] : memref<4x32xbf16, #tpu.memory_space<vmem>>, vector<4x32xbf16>
    %cst_13 = arith.constant dense<0.000000e+00> : vector<2x32xf32>
    %13 = tpu.matmul %1, %12, %cst_13 {dimension_numbers = #tpu.dot_dimension_numbers<[1], [0], [0], [1], [0, 0, 1, 1], [], []>} : vector<2x4xbf16>, vector<4x32xbf16>, vector<2x32xf32> -> vector<2x32xf32>
    %c0_14 = arith.constant 0 : index
    %c0_15 = arith.constant 0 : index
    %14 = vector.load %arg7[%c0_14, %c0_15] : memref<32x32xbf16, #tpu.memory_space<vmem>>, vector<32x32xbf16>
    %cst_16 = arith.constant dense<0.000000e+00> : vector<2x32xf32>
    %15 = tpu.matmul %3, %14, %cst_16 {dimension_numbers = #tpu.dot_dimension_numbers<[1], [0], [0], [1], [0, 0, 1, 1], [], []>} : vector<2x32xbf16>, vector<32x32xbf16>, vector<2x32xf32> -> vector<2x32xf32>
    %16 = arith.addf %13, %15 : vector<2x32xf32>
    %c0_17 = arith.constant 0 : index
    %c0_18 = arith.constant 0 : index
    %17 = vector.load %arg5[%c0_17, %c0_18] : memref<4x32xbf16, #tpu.memory_space<vmem>>, vector<4x32xbf16>
    %cst_19 = arith.constant dense<0.000000e+00> : vector<2x32xf32>
    %18 = tpu.matmul %1, %17, %cst_19 {dimension_numbers = #tpu.dot_dimension_numbers<[1], [0], [0], [1], [0, 0, 1, 1], [], []>} : vector<2x4xbf16>, vector<4x32xbf16>, vector<2x32xf32> -> vector<2x32xf32>
    %c0_20 = arith.constant 0 : index
    %c0_21 = arith.constant 0 : index
    %19 = vector.load %arg8[%c0_20, %c0_21] : memref<32x32xbf16, #tpu.memory_space<vmem>>, vector<32x32xbf16>
    %cst_22 = arith.constant dense<0.000000e+00> : vector<2x32xf32>
    %20 = tpu.matmul %3, %19, %cst_22 {dimension_numbers = #tpu.dot_dimension_numbers<[1], [0], [0], [1], [0, 0, 1, 1], [], []>} : vector<2x32xbf16>, vector<32x32xbf16>, vector<2x32xf32> -> vector<2x32xf32>
    %21 = arith.addf %18, %20 : vector<2x32xf32>
    %c0_23 = arith.constant 0 : index
    %c0_24 = arith.constant 0 : index
    %22 = vector.load %arg9[%c0_23, %c0_24] : memref<32x32xbf16, #tpu.memory_space<vmem>>, vector<32x32xbf16>
    %cst_25 = arith.constant dense<0.000000e+00> : vector<2x32xf32>
    %23 = tpu.matmul %6, %22, %cst_25 {dimension_numbers = #tpu.dot_dimension_numbers<[1], [0], [0], [1], [0, 0, 1, 1], [], []>} : vector<2x32xbf16>, vector<32x32xbf16>, vector<2x32xf32> -> vector<2x32xf32>
    %c0_26 = arith.constant 0 : index
    %c0_27 = arith.constant 0 : index
    %24 = vector.load %arg10[%c0_26, %c0_27] : memref<32x32xbf16, #tpu.memory_space<vmem>>, vector<32x32xbf16>
    %cst_28 = arith.constant dense<0.000000e+00> : vector<2x32xf32>
    %25 = tpu.matmul %6, %24, %cst_28 {dimension_numbers = #tpu.dot_dimension_numbers<[1], [0], [0], [1], [0, 0, 1, 1], [], []>} : vector<2x32xbf16>, vector<32x32xbf16>, vector<2x32xf32> -> vector<2x32xf32>
    %c0_29 = arith.constant 0 : index
    %c0_30 = arith.constant 0 : index
    %26 = vector.load %arg11[%c0_29, %c0_30] : memref<32x32xbf16, #tpu.memory_space<vmem>>, vector<32x32xbf16>
    %cst_31 = arith.constant dense<0.000000e+00> : vector<2x32xf32>
    %27 = tpu.matmul %6, %26, %cst_31 {dimension_numbers = #tpu.dot_dimension_numbers<[1], [0], [0], [1], [0, 0, 1, 1], [], []>} : vector<2x32xbf16>, vector<32x32xbf16>, vector<2x32xf32> -> vector<2x32xf32>
    %28 = arith.addf %11, %23 : vector<2x32xf32>
    %c0_32 = arith.constant 0 : index
    %c0_33 = arith.constant 0 : index
    %29 = vector.load %arg12[%c0_32, %c0_33] : memref<1x32xf32, #tpu.memory_space<vmem>>, vector<1x32xf32>
    %30 = vector.broadcast %29 : vector<1x32xf32> to vector<2x32xf32>
    %31 = arith.addf %28, %30 : vector<2x32xf32>
    %32 = arith.negf %31 : vector<2x32xf32>
    %33 = math.exp %32 : vector<2x32xf32>
    %cst_34 = arith.constant 1.000000e+00 : f32
    %34 = vector.broadcast %cst_34 : f32 to vector<2x32xf32>
    %35 = arith.addf %34, %33 : vector<2x32xf32>
    %36 = arith.divf %34, %35 : vector<2x32xf32>
    %37 = arith.addf %16, %25 : vector<2x32xf32>
    %c0_35 = arith.constant 0 : index
    %c0_36 = arith.constant 0 : index
    %38 = vector.load %arg13[%c0_35, %c0_36] : memref<1x32xf32, #tpu.memory_space<vmem>>, vector<1x32xf32>
    %39 = vector.broadcast %38 : vector<1x32xf32> to vector<2x32xf32>
    %40 = arith.addf %37, %39 : vector<2x32xf32>
    %41 = arith.negf %40 : vector<2x32xf32>
    %42 = math.exp %41 : vector<2x32xf32>
    %cst_37 = arith.constant 1.000000e+00 : f32
    %43 = vector.broadcast %cst_37 : f32 to vector<2x32xf32>
    %44 = arith.addf %43, %42 : vector<2x32xf32>
    %45 = arith.divf %43, %44 : vector<2x32xf32>
    %c0_38 = arith.constant 0 : index
    %c0_39 = arith.constant 0 : index
    %46 = vector.load %arg14[%c0_38, %c0_39] : memref<1x32xf32, #tpu.memory_space<vmem>>, vector<1x32xf32>
    %47 = vector.broadcast %46 : vector<1x32xf32> to vector<2x32xf32>
    %48 = arith.addf %21, %47 : vector<2x32xf32>
    %c0_40 = arith.constant 0 : index
    %c0_41 = arith.constant 0 : index
    %49 = vector.load %arg15[%c0_40, %c0_41] : memref<1x32xf32, #tpu.memory_space<vmem>>, vector<1x32xf32>
    %50 = vector.broadcast %49 : vector<1x32xf32> to vector<2x32xf32>
    %51 = arith.addf %27, %50 : vector<2x32xf32>
    %52 = arith.mulf %36, %51 : vector<2x32xf32>
    %53 = arith.addf %48, %52 : vector<2x32xf32>
    %54 = math.tanh %53 : vector<2x32xf32>
    %cst_42 = arith.constant 1.000000e+00 : f32
    %55 = vector.broadcast %cst_42 : f32 to vector<2x32xf32>
    %56 = arith.subf %55, %45 : vector<2x32xf32>
    %57 = arith.mulf %56, %54 : vector<2x32xf32>
    %58 = arith.mulf %45, %5 : vector<2x32xf32>
    %59 = arith.addf %57, %58 : vector<2x32xf32>
    %c0_43 = arith.constant 0 : index
    %c0_44 = arith.constant 0 : index
    %c0_45 = arith.constant 0 : index
    %60 = vector.load %arg31[%c0_43, %c0_44, %c0_45] : memref<2x2x32xf32, #tpu.memory_space<vmem>>, vector<1x2x32xf32>
    %61 = vector.shape_cast %60 : vector<1x2x32xf32> to vector<2x32xf32>
    %62 = vector.shape_cast %59 : vector<2x32xf32> to vector<1x2x32xf32>
    tpu.vector_store %arg31[%c0_43, %c0_44, %c0_45], %62 {strides = array<i32>} : memref<2x2x32xf32, #tpu.memory_space<vmem>>, vector<1x2x32xf32>,
    %63 = arith.truncf %59 : vector<2x32xf32> to vector<2x32xbf16>
    %c1 = arith.constant 1 : index
    %c0_46 = arith.constant 0 : index
    %c0_47 = arith.constant 0 : index
    %64 = vector.load %arg2[%c1, %c0_46, %c0_47] : memref<2x2x32xf32, #tpu.memory_space<vmem>>, vector<1x2x32xf32>
    %65 = vector.shape_cast %64 : vector<1x2x32xf32> to vector<2x32xf32>
    %66 = arith.truncf %65 : vector<2x32xf32> to vector<2x32xbf16>
    %c0_48 = arith.constant 0 : index
    %c0_49 = arith.constant 0 : index
    %67 = vector.load %arg16[%c0_48, %c0_49] : memref<32x32xbf16, #tpu.memory_space<vmem>>, vector<32x32xbf16>
    %cst_50 = arith.constant dense<0.000000e+00> : vector<2x32xf32>
    %68 = tpu.matmul %63, %67, %cst_50 {dimension_numbers = #tpu.dot_dimension_numbers<[1], [0], [0], [1], [0, 0, 1, 1], [], []>} : vector<2x32xbf16>, vector<32x32xbf16>, vector<2x32xf32> -> vector<2x32xf32>
    %c0_51 = arith.constant 0 : index
    %c0_52 = arith.constant 0 : index
    %69 = vector.load %arg17[%c0_51, %c0_52] : memref<32x32xbf16, #tpu.memory_space<vmem>>, vector<32x32xbf16>
    %cst_53 = arith.constant dense<0.000000e+00> : vector<2x32xf32>
    %70 = tpu.matmul %63, %69, %cst_53 {dimension_numbers = #tpu.dot_dimension_numbers<[1], [0], [0], [1], [0, 0, 1, 1], [], []>} : vector<2x32xbf16>, vector<32x32xbf16>, vector<2x32xf32> -> vector<2x32xf32>
    %c0_54 = arith.constant 0 : index
    %c0_55 = arith.constant 0 : index
    %71 = vector.load %arg18[%c0_54, %c0_55] : memref<32x32xbf16, #tpu.memory_space<vmem>>, vector<32x32xbf16>
    %cst_56 = arith.constant dense<0.000000e+00> : vector<2x32xf32>
    %72 = tpu.matmul %63, %71, %cst_56 {dimension_numbers = #tpu.dot_dimension_numbers<[1], [0], [0], [1], [0, 0, 1, 1], [], []>} : vector<2x32xbf16>, vector<32x32xbf16>, vector<2x32xf32> -> vector<2x32xf32>
    %c0_57 = arith.constant 0 : index
    %c0_58 = arith.constant 0 : index
    %73 = vector.load %arg19[%c0_57, %c0_58] : memref<32x32xbf16, #tpu.memory_space<vmem>>, vector<32x32xbf16>
    %cst_59 = arith.constant dense<0.000000e+00> : vector<2x32xf32>
    %74 = tpu.matmul %66, %73, %cst_59 {dimension_numbers = #tpu.dot_dimension_numbers<[1], [0], [0], [1], [0, 0, 1, 1], [], []>} : vector<2x32xbf16>, vector<32x32xbf16>, vector<2x32xf32> -> vector<2x32xf32>
    %c0_60 = arith.constant 0 : index
    %c0_61 = arith.constant 0 : index
    %75 = vector.load %arg20[%c0_60, %c0_61] : memref<32x32xbf16, #tpu.memory_space<vmem>>, vector<32x32xbf16>
    %cst_62 = arith.constant dense<0.000000e+00> : vector<2x32xf32>
    %76 = tpu.matmul %66, %75, %cst_62 {dimension_numbers = #tpu.dot_dimension_numbers<[1], [0], [0], [1], [0, 0, 1, 1], [], []>} : vector<2x32xbf16>, vector<32x32xbf16>, vector<2x32xf32> -> vector<2x32xf32>
    %c0_63 = arith.constant 0 : index
    %c0_64 = arith.constant 0 : index
    %77 = vector.load %arg21[%c0_63, %c0_64] : memref<32x32xbf16, #tpu.memory_space<vmem>>, vector<32x32xbf16>
    %cst_65 = arith.constant dense<0.000000e+00> : vector<2x32xf32>
    %78 = tpu.matmul %66, %77, %cst_65 {dimension_numbers = #tpu.dot_dimension_numbers<[1], [0], [0], [1], [0, 0, 1, 1], [], []>} : vector<2x32xbf16>, vector<32x32xbf16>, vector<2x32xf32> -> vector<2x32xf32>
    %79 = arith.addf %68, %74 : vector<2x32xf32>
    %c0_66 = arith.constant 0 : index
    %c0_67 = arith.constant 0 : index
    %80 = vector.load %arg22[%c0_66, %c0_67] : memref<1x32xf32, #tpu.memory_space<vmem>>, vector<1x32xf32>
    %81 = vector.broadcast %80 : vector<1x32xf32> to vector<2x32xf32>
    %82 = arith.addf %79, %81 : vector<2x32xf32>
    %83 = arith.negf %82 : vector<2x32xf32>
    %84 = math.exp %83 : vector<2x32xf32>
    %cst_68 = arith.constant 1.000000e+00 : f32
    %85 = vector.broadcast %cst_68 : f32 to vector<2x32xf32>
    %86 = arith.addf %85, %84 : vector<2x32xf32>
    %87 = arith.divf %85, %86 : vector<2x32xf32>
    %88 = arith.addf %70, %76 : vector<2x32xf32>
    %c0_69 = arith.constant 0 : index
    %c0_70 = arith.constant 0 : index
    %89 = vector.load %arg23[%c0_69, %c0_70] : memref<1x32xf32, #tpu.memory_space<vmem>>, vector<1x32xf32>
    %90 = vector.broadcast %89 : vector<1x32xf32> to vector<2x32xf32>
    %91 = arith.addf %88, %90 : vector<2x32xf32>
    %92 = arith.negf %91 : vector<2x32xf32>
    %93 = math.exp %92 : vector<2x32xf32>
    %cst_71 = arith.constant 1.000000e+00 : f32
    %94 = vector.broadcast %cst_71 : f32 to vector<2x32xf32>
    %95 = arith.addf %94, %93 : vector<2x32xf32>
    %96 = arith.divf %94, %95 : vector<2x32xf32>
    %c0_72 = arith.constant 0 : index
    %c0_73 = arith.constant 0 : index
    %97 = vector.load %arg24[%c0_72, %c0_73] : memref<1x32xf32, #tpu.memory_space<vmem>>, vector<1x32xf32>
    %98 = vector.broadcast %97 : vector<1x32xf32> to vector<2x32xf32>
    %99 = arith.addf %72, %98 : vector<2x32xf32>
    %c0_74 = arith.constant 0 : index
    %c0_75 = arith.constant 0 : index
    %100 = vector.load %arg25[%c0_74, %c0_75] : memref<1x32xf32, #tpu.memory_space<vmem>>, vector<1x32xf32>
    %101 = vector.broadcast %100 : vector<1x32xf32> to vector<2x32xf32>
    %102 = arith.addf %78, %101 : vector<2x32xf32>
    %103 = arith.mulf %87, %102 : vector<2x32xf32>
    %104 = arith.addf %99, %103 : vector<2x32xf32>
    %105 = math.tanh %104 : vector<2x32xf32>
    %cst_76 = arith.constant 1.000000e+00 : f32
    %106 = vector.broadcast %cst_76 : f32 to vector<2x32xf32>
    %107 = arith.subf %106, %96 : vector<2x32xf32>
    %108 = arith.mulf %107, %105 : vector<2x32xf32>
    %109 = arith.mulf %96, %65 : vector<2x32xf32>
    %110 = arith.addf %108, %109 : vector<2x32xf32>
    %c1_77 = arith.constant 1 : index
    %c0_78 = arith.constant 0 : index
    %c0_79 = arith.constant 0 : index
    %111 = vector.load %arg31[%c1_77, %c0_78, %c0_79] : memref<2x2x32xf32, #tpu.memory_space<vmem>>, vector<1x2x32xf32>
    %112 = vector.shape_cast %111 : vector<1x2x32xf32> to vector<2x32xf32>
    %113 = vector.shape_cast %110 : vector<2x32xf32> to vector<1x2x32xf32>
    tpu.vector_store %arg31[%c1_77, %c0_78, %c0_79], %113 {strides = array<i32>} : memref<2x2x32xf32, #tpu.memory_space<vmem>>, vector<1x2x32xf32>,
    %114 = arith.truncf %110 : vector<2x32xf32> to vector<2x32xbf16>
    %c0_80 = arith.constant 0 : index
    %c0_81 = arith.constant 0 : index
    %115 = vector.load %arg26[%c0_80, %c0_81] : memref<4x8xbf16, #tpu.memory_space<vmem>>, vector<4x8xbf16>
    %cst_82 = arith.constant dense<0.000000e+00> : vector<2x8xf32>
    %116 = tpu.matmul %1, %115, %cst_82 {dimension_numbers = #tpu.dot_dimension_numbers<[1], [0], [0], [1], [0, 0, 1, 1], [], []>} : vector<2x4xbf16>, vector<4x8xbf16>, vector<2x8xf32> -> vector<2x8xf32>
    %c0_83 = arith.constant 0 : index
    %c0_84 = arith.constant 0 : index
    %117 = vector.load %arg27[%c0_83, %c0_84] : memref<32x8xbf16, #tpu.memory_space<vmem>>, vector<32x8xbf16>
    %cst_85 = arith.constant dense<0.000000e+00> : vector<2x8xf32>
    %118 = tpu.matmul %3, %117, %cst_85 {dimension_numbers = #tpu.dot_dimension_numbers<[1], [0], [0], [1], [0, 0, 1, 1], [], []>} : vector<2x32xbf16>, vector<32x8xbf16>, vector<2x8xf32> -> vector<2x8xf32>
    %119 = arith.addf %116, %118 : vector<2x8xf32>
    %c0_86 = arith.constant 0 : index
    %c0_87 = arith.constant 0 : index
    %120 = vector.load %arg28[%c0_86, %c0_87] : memref<32x8xbf16, #tpu.memory_space<vmem>>, vector<32x8xbf16>
    %cst_88 = arith.constant dense<0.000000e+00> : vector<2x8xf32>
    %121 = tpu.matmul %114, %120, %cst_88 {dimension_numbers = #tpu.dot_dimension_numbers<[1], [0], [0], [1], [0, 0, 1, 1], [], []>} : vector<2x32xbf16>, vector<32x8xbf16>, vector<2x8xf32> -> vector<2x8xf32>
    %122 = arith.addf %119, %121 : vector<2x8xf32>
    %c0_89 = arith.constant 0 : index
    %c0_90 = arith.constant 0 : index
    %123 = vector.load %arg29[%c0_89, %c0_90] : memref<1x8xf32, #tpu.memory_space<vmem>>, vector<1x8xf32>
    %124 = vector.broadcast %123 : vector<1x8xf32> to vector<2x8xf32>
    %125 = arith.addf %122, %124 : vector<2x8xf32>
    %c0_91 = arith.constant 0 : index
    %c0_92 = arith.constant 0 : index
    %126 = vector.load %arg30[%c0_91, %c0_92] : memref<2x8xf32, #tpu.memory_space<vmem>>, vector<2x8xf32>
    tpu.vector_store %arg30[%c0_91, %c0_92], %125 {strides = array<i32>} : memref<2x8xf32, #tpu.memory_space<vmem>>, vector<2x8xf32>,
    return
  }
}

</mosaic_0001>

<llo_original>
// kernel: decoder_rnn_forward.1
$region0: #{decoder_rnn_forward.1}
  #allocation0 [shape = 'u32[]', space=smem, size = 0x4, offset = 0x4, fixed_abs, tag = 'smem constant byte address 0x4 - core index']
  #allocation1 [shape = 'u32[144,128]{1,0:T(1,128)}', space=vmem, size = 0x12000, scoped, tag = 'internal scratch']
  %s0 = inlined_call_operand.smem [shape: u32[32], index: -1, kind: input, shape index: {}]
  %s1 = sld [smem:[%s0]]
  %s2 = scalar_lea.smem %s0, 1
  %s3 = sld [smem:[%s2]]
  %s4 = scalar_lea.smem %s0, 2
  %s5 = sld [smem:[%s4]]
  %s6 = scalar_lea.smem %s0, 3
  %s7 = sld [smem:[%s6]]
  %s8 = scalar_lea.smem %s0, 4
  %s9 = sld [smem:[%s8]]
  %s10 = scalar_lea.smem %s0, 5
  %s11 = sld [smem:[%s10]]
  %s12 = scalar_lea.smem %s0, 6
  %s13 = sld [smem:[%s12]]
  %s14 = scalar_lea.smem %s0, 7
  %s15 = sld [smem:[%s14]]
  %s16 = scalar_lea.smem %s0, 8
  %s17 = sld [smem:[%s16]]
  %s18 = scalar_lea.smem %s0, 9
  %s19 = sld [smem:[%s18]]
  %s20 = scalar_lea.smem %s0, 10
  %s21 = sld [smem:[%s20]]
  %s22 = scalar_lea.smem %s0, 11
  %s23 = sld [smem:[%s22]]
  %s24 = scalar_lea.smem %s0, 12
  %s25 = sld [smem:[%s24]]
  %s26 = scalar_lea.smem %s0, 13
  %s27 = sld [smem:[%s26]]
  %s28 = scalar_lea.smem %s0, 14
  %s29 = sld [smem:[%s28]]
  %s30 = scalar_lea.smem %s0, 15
  %s31 = sld [smem:[%s30]]
  %s32 = scalar_lea.smem %s0, 16
  %s33 = sld [smem:[%s32]]
  %s34 = scalar_lea.smem %s0, 17
  %s35 = sld [smem:[%s34]]
  %s36 = scalar_lea.smem %s0, 18
  %s37 = sld [smem:[%s36]]
  %s38 = scalar_lea.smem %s0, 19
  %s39 = sld [smem:[%s38]]
  %s40 = scalar_lea.smem %s0, 20
  %s41 = sld [smem:[%s40]]
  %s42 = scalar_lea.smem %s0, 21
  %s43 = sld [smem:[%s42]]
  %s44 = scalar_lea.smem %s0, 22
  %s45 = sld [smem:[%s44]]
  %s46 = scalar_lea.smem %s0, 23
  %s47 = sld [smem:[%s46]]
  %s48 = scalar_lea.smem %s0, 24
  %s49 = sld [smem:[%s48]]
  %s50 = scalar_lea.smem %s0, 25
  %s51 = sld [smem:[%s50]]
  %s52 = scalar_lea.smem %s0, 26
  %s53 = sld [smem:[%s52]]
  %s54 = scalar_lea.smem %s0, 27
  %s55 = sld [smem:[%s54]]
  %s56 = scalar_lea.smem %s0, 28
  %s57 = sld [smem:[%s56]]
  %s58 = scalar_lea.smem %s0, 29
  %s59 = sld [smem:[%s58]]
  %s60 = scalar_lea.smem %s0, 30
  %s61 = sld [smem:[%s60]]
  %s62 = scalar_lea.smem %s0, 31
  %s63 = sld [smem:[%s62]]
  %64 = xla_tuple %s61, %s63
  %s65 = sld [smem:[#allocation0]]
  $region194: #{decoder_rnn_forward.1} parent=0
    _
  %s67 = ssub.s32 1, %s65
  %s68 = scalar_select 0, %s67, %s65
  $region1: #{decoder_rnn_forward.1} parent=0
    #allocation2 [shape = 'u8[1024]{0}', space=vmem, size = 0x400, scoped, tag = 'input window, operand 0, single buffered']
    #allocation3 [shape = 's32[1]{0}', space=sflag, size = 0x4, scoped, tag = 'scoped memory for decoder_rnn_forward.1']
    #allocation4 [shape = 's32[1]{0}', space=sflag, size = 0x4, scoped, tag = 'scoped memory for decoder_rnn_forward.1']
    #allocation5 [shape = 'u8[1024]{0}', space=vmem, size = 0x400, scoped, tag = 'input window, operand 1, single buffered']
    #allocation6 [shape = 's32[1]{0}', space=sflag, size = 0x4, scoped, tag = 'scoped memory for decoder_rnn_forward.1']
    #allocation7 [shape = 'u8[2048]{0}', space=vmem, size = 0x800, scoped, tag = 'input window, operand 2, single buffered']
    #allocation8 [shape = 'u8[8192]{0}', space=vmem, size = 0x2000, scoped, tag = 'input window, operand 16, single buffered']
    #allocation9 [shape = 's32[1]{0}', space=sflag, size = 0x4, scoped, tag = 'scoped memory for decoder_rnn_forward.1']
    #allocation10 [shape = 'u8[8192]{0}', space=vmem, size = 0x2000, scoped, tag = 'input window, operand 17, single buffered']
    #allocation11 [shape = 'u8[8192]{0}', space=vmem, size = 0x2000, scoped, tag = 'input window, operand 18, single buffered']
    #allocation12 [shape = 's32[1]{0}', space=sflag, size = 0x4, scoped, tag = 'scoped memory for decoder_rnn_forward.1']
    #allocation13 [shape = 'u8[8192]{0}', space=vmem, size = 0x2000, scoped, tag = 'input window, operand 19, single buffered']
    #allocation14 [shape = 'u8[8192]{0}', space=vmem, size = 0x2000, scoped, tag = 'input window, operand 20, single buffered']
    #allocation15 [shape = 's32[1]{0}', space=sflag, size = 0x4, scoped, tag = 'scoped memory for decoder_rnn_forward.1']
    #allocation16 [shape = 'u8[8192]{0}', space=vmem, size = 0x2000, scoped, tag = 'input window, operand 21, single buffered']
    #allocation17 [shape = 'u8[512]{0}', space=vmem, size = 0x400, scoped, tag = 'input window, operand 23, single buffered']
    #allocation18 [shape = 's32[1]{0}', space=sflag, size = 0x4, scoped, tag = 'scoped memory for decoder_rnn_forward.1']
    #allocation19 [shape = 'u8[512]{0}', space=vmem, size = 0x400, scoped, tag = 'input window, operand 24, single buffered']
    #allocation20 [shape = 'u8[512]{0}', space=vmem, size = 0x400, scoped, tag = 'input window, operand 25, single buffered']
    #allocation21 [shape = 's32[1]{0}', space=sflag, size = 0x4, scoped, tag = 'scoped memory for decoder_rnn_forward.1']
    #allocation22 [shape = 'u8[1024]{0}', space=vmem, size = 0x400, scoped, tag = 'input window, operand 26, single buffered']
    #allocation23 [shape = 'u8[512]{0}', space=vmem, size = 0x400, scoped, tag = 'input window, operand 29, single buffered']
    #allocation24 [shape = 's32[1]{0}', space=sflag, size = 0x4, scoped, tag = 'scoped memory for decoder_rnn_forward.1']
    #allocation25 [shape = 'u8[1024]{0}', space=vmem, size = 0x400, scoped, tag = 'output window, operand 0, single buffered']
    #allocation26 [shape = 'u8[2048]{0}', space=vmem, size = 0x800, scoped, tag = 'output window, operand 1, single buffered']
    #allocation27 [shape = 's32[1]{0}', space=sflag, size = 0x4, scoped, tag = 'scoped memory for decoder_rnn_forward.1']
    %69 = vsyncpa [#allocation3], 0
    %70 = vsyncpa [#allocation6], 0
    %71 = vsyncpa [#allocation9], 0
    %72 = vsyncpa [#allocation12], 0
    %73 = vsyncpa [#allocation15], 0
    %74 = vsyncpa [#allocation18], 0
    %75 = vsyncpa [#allocation21], 0
    %76 = vsyncpa [#allocation24], 0
    %77 = vsyncpa [#allocation4], 0
    %78 = vsyncpa [#allocation27], 0
    // Predicated region
    $region2: #{decoder_rnn_forward.1} parent=1 // pred_check
      _
    $region3: #{decoder_rnn_forward.1} parent=1 // pred_check_branch
      %80 = sbr.rel (0) target = $region5
    $region4: #{decoder_rnn_forward.1} parent=1 // pred_region
      %s82 = ssub.s32 32, 32
      %83 = vsyncadd [#allocation3], %s82
      %s85 = sshll.u32 [#allocation2], 4
      %s86 = int_to_ptr.vmem [resolvable:$true] %s85
      %88 = dma.hbm_to_vmem [thread:$0]  %s1, 32, %s86, [#allocation3]
    $region5: #{decoder_rnn_forward.1} parent=1 // pred_fallthru
      _
    // Predicated region
    $region6: #{decoder_rnn_forward.1} parent=1 // pred_check
      _
    $region7: #{decoder_rnn_forward.1} parent=1 // pred_check_branch
      %90 = sbr.rel (0) target = $region9
    $region8: #{decoder_rnn_forward.1} parent=1 // pred_region
      %s92 = ssub.s32 32, 32
      %93 = vsyncadd [#allocation6], %s92
      %s95 = sshll.u32 [#allocation5], 4
      %s96 = int_to_ptr.vmem [resolvable:$true] %s95
      %98 = dma.hbm_to_vmem [thread:$0]  %s3, 32, %s96, [#allocation6]
    $region9: #{decoder_rnn_forward.1} parent=1 // pred_fallthru
      _
    // Predicated region
    $region10: #{decoder_rnn_forward.1} parent=1 // pred_check
      _
    $region11: #{decoder_rnn_forward.1} parent=1 // pred_check_branch
      %100 = sbr.rel (0) target = $region13
    $region12: #{decoder_rnn_forward.1} parent=1 // pred_region
      %s102 = ssub.s32 64, 64
      %103 = vsyncadd [#allocation6], %s102
      %s104 = sshll.u32 [#allocation7], 4
      %s105 = int_to_ptr.vmem [resolvable:$true] %s104
      %110 = dma.hbm_to_vmem [thread:$0]  %s5, 64, %s105, [#allocation6], 32, 32, 2
    $region13: #{decoder_rnn_forward.1} parent=1 // pred_fallthru
      _
    // Predicated region
    $region14: #{decoder_rnn_forward.1} parent=1 // pred_check
      _
    $region15: #{decoder_rnn_forward.1} parent=1 // pred_check_branch
      %112 = sbr.rel (0) target = $region17
    $region16: #{decoder_rnn_forward.1} parent=1 // pred_region
      _
    $region17: #{decoder_rnn_forward.1} parent=1 // pred_fallthru
      _
    // Predicated region
    $region18: #{decoder_rnn_forward.1} parent=1 // pred_check
      _
    $region19: #{decoder_rnn_forward.1} parent=1 // pred_check_branch
      %114 = sbr.rel (0) target = $region21
    $region20: #{decoder_rnn_forward.1} parent=1 // pred_region
      _
    $region21: #{decoder_rnn_forward.1} parent=1 // pred_fallthru
      _
    // Predicated region
    $region22: #{decoder_rnn_forward.1} parent=1 // pred_check
      _
    $region23: #{decoder_rnn_forward.1} parent=1 // pred_check_branch
      %116 = sbr.rel (0) target = $region25
    $region24: #{decoder_rnn_forward.1} parent=1 // pred_region
      _
    $region25: #{decoder_rnn_forward.1} parent=1 // pred_fallthru
      _
    // Predicated region
    $region26: #{decoder_rnn_forward.1} parent=1 // pred_check
      _
    $region27: #{decoder_rnn_forward.1} parent=1 // pred_check_branch
      %118 = sbr.rel (0) target = $region29
    $region28: #{decoder_rnn_forward.1} parent=1 // pred_region
      _
    $region29: #{decoder_rnn_forward.1} parent=1 // pred_fallthru
      _
    // Predicated region
    $region30: #{decoder_rnn_forward.1} parent=1 // pred_check
      _
    $region31: #{decoder_rnn_forward.1} parent=1 // pred_check_branch
      %120 = sbr.rel (0) target = $region33
    $region32: #{decoder_rnn_forward.1} parent=1 // pred_region
      _
    $region33: #{decoder_rnn_forward.1} parent=1 // pred_fallthru
      _
    // Predicated region
    $region34: #{decoder_rnn_forward.1} parent=1 // pred_check
      _
    $region35: #{decoder_rnn_forward.1} parent=1 // pred_check_branch
      %122 = sbr.rel (0) target = $region37
    $region36: #{decoder_rnn_forward.1} parent=1 // pred_region
      _
    $region37: #{decoder_rnn_forward.1} parent=1 // pred_fallthru
      _
    // Predicated region
    $region38: #{decoder_rnn_forward.1} parent=1 // pred_check
      _
    $region39: #{decoder_rnn_forward.1} parent=1 // pred_check_branch
      %124 = sbr.rel (0) target = $region41
    $region40: #{decoder_rnn_forward.1} parent=1 // pred_region
      _
    $region41: #{decoder_rnn_forward.1} parent=1 // pred_fallthru
      _
    // Predicated region
    $region42: #{decoder_rnn_forward.1} parent=1 // pred_check
      _
    $region43: #{decoder_rnn_forward.1} parent=1 // pred_check_branch
      %126 = sbr.rel (0) target = $region45
    $region44: #{decoder_rnn_forward.1} parent=1 // pred_region
      _
    $region45: #{decoder_rnn_forward.1} parent=1 // pred_fallthru
      _
    // Predicated region
    $region46: #{decoder_rnn_forward.1} parent=1 // pred_check
      _
    $region47: #{decoder_rnn_forward.1} parent=1 // pred_check_branch
      %128 = sbr.rel (0) target = $region49
    $region48: #{decoder_rnn_forward.1} parent=1 // pred_region
      _
    $region49: #{decoder_rnn_forward.1} parent=1 // pred_fallthru
      _
    // Predicated region
    $region50: #{decoder_rnn_forward.1} parent=1 // pred_check
      _
    $region51: #{decoder_rnn_forward.1} parent=1 // pred_check_branch
      %130 = sbr.rel (0) target = $region53
    $region52: #{decoder_rnn_forward.1} parent=1 // pred_region
      _
    $region53: #{decoder_rnn_forward.1} parent=1 // pred_fallthru
      _
    // Predicated region
    $region54: #{decoder_rnn_forward.1} parent=1 // pred_check
      _
    $region55: #{decoder_rnn_forward.1} parent=1 // pred_check_branch
      %132 = sbr.rel (0) target = $region57
    $region56: #{decoder_rnn_forward.1} parent=1 // pred_region
      _
    $region57: #{decoder_rnn_forward.1} parent=1 // pred_fallthru
      _
    // Predicated region
    $region58: #{decoder_rnn_forward.1} parent=1 // pred_check
      _
    $region59: #{decoder_rnn_forward.1} parent=1 // pred_check_branch
      %134 = sbr.rel (0) target = $region61
    $region60: #{decoder_rnn_forward.1} parent=1 // pred_region
      _
    $region61: #{decoder_rnn_forward.1} parent=1 // pred_fallthru
      _
    // Predicated region
    $region62: #{decoder_rnn_forward.1} parent=1 // pred_check
      _
    $region63: #{decoder_rnn_forward.1} parent=1 // pred_check_branch
      %136 = sbr.rel (0) target = $region65
    $region64: #{decoder_rnn_forward.1} parent=1 // pred_region
      _
    $region65: #{decoder_rnn_forward.1} parent=1 // pred_fallthru
      _
    // Predicated region
    $region66: #{decoder_rnn_forward.1} parent=1 // pred_check
      _
    $region67: #{decoder_rnn_forward.1} parent=1 // pred_check_branch
      %138 = sbr.rel (0) target = $region69
    $region68: #{decoder_rnn_forward.1} parent=1 // pred_region
      %s140 = ssub.s32 256, 256
      %141 = vsyncadd [#allocation9], %s140
      %s142 = sshll.u32 [#allocation8], 4
      %s143 = int_to_ptr.vmem [resolvable:$true] %s142
      %148 = dma.hbm_to_vmem [thread:$0]  %s33, 256, %s143, [#allocation9], 64, 64, 4
    $region69: #{decoder_rnn_forward.1} parent=1 // pred_fallthru
      _
    // Predicated region
    $region70: #{decoder_rnn_forward.1} parent=1 // pred_check
      _
    $region71: #{decoder_rnn_forward.1} parent=1 // pred_check_branch
      %150 = sbr.rel (0) target = $region73
    $region72: #{decoder_rnn_forward.1} parent=1 // pred_region
      %s152 = ssub.s32 256, 256
      %153 = vsyncadd [#allocation9], %s152
      %s154 = sshll.u32 [#allocation10], 4
      %s155 = int_to_ptr.vmem [resolvable:$true] %s154
      %160 = dma.hbm_to_vmem [thread:$0]  %s35, 256, %s155, [#allocation9], 64, 64, 4
    $region73: #{decoder_rnn_forward.1} parent=1 // pred_fallthru
      _
    // Predicated region
    $region74: #{decoder_rnn_forward.1} parent=1 // pred_check
      _
    $region75: #{decoder_rnn_forward.1} parent=1 // pred_check_branch
      %162 = sbr.rel (0) target = $region77
    $region76: #{decoder_rnn_forward.1} parent=1 // pred_region
      %s164 = ssub.s32 256, 256
      %165 = vsyncadd [#allocation12], %s164
      %s166 = sshll.u32 [#allocation11], 4
      %s167 = int_to_ptr.vmem [resolvable:$true] %s166
      %172 = dma.hbm_to_vmem [thread:$0]  %s37, 256, %s167, [#allocation12], 64, 64, 4
    $region77: #{decoder_rnn_forward.1} parent=1 // pred_fallthru
      _
    // Predicated region
    $region78: #{decoder_rnn_forward.1} parent=1 // pred_check
      _
    $region79: #{decoder_rnn_forward.1} parent=1 // pred_check_branch
      %174 = sbr.rel (0) target = $region81
    $region80: #{decoder_rnn_forward.1} parent=1 // pred_region
      %s176 = ssub.s32 256, 256
      %177 = vsyncadd [#allocation12], %s176
      %s178 = sshll.u32 [#allocation13], 4
      %s179 = int_to_ptr.vmem [resolvable:$true] %s178
      %184 = dma.hbm_to_vmem [thread:$0]  %s39, 256, %s179, [#allocation12], 64, 64, 4
    $region81: #{decoder_rnn_forward.1} parent=1 // pred_fallthru
      _
    // Predicated region
    $region82: #{decoder_rnn_forward.1} parent=1 // pred_check
      _
    $region83: #{decoder_rnn_forward.1} parent=1 // pred_check_branch
      %186 = sbr.rel (0) target = $region85
    $region84: #{decoder_rnn_forward.1} parent=1 // pred_region
      %s188 = ssub.s32 256, 256
      %189 = vsyncadd [#allocation15], %s188
      %s190 = sshll.u32 [#allocation14], 4
      %s191 = int_to_ptr.vmem [resolvable:$true] %s190
      %196 = dma.hbm_to_vmem [thread:$0]  %s41, 256, %s191, [#allocation15], 64, 64, 4
    $region85: #{decoder_rnn_forward.1} parent=1 // pred_fallthru
      _
    // Predicated region
    $region86: #{decoder_rnn_forward.1} parent=1 // pred_check
      _
    $region87: #{decoder_rnn_forward.1} parent=1 // pred_check_branch
      %198 = sbr.rel (0) target = $region89
    $region88: #{decoder_rnn_forward.1} parent=1 // pred_region
      %s200 = ssub.s32 256, 256
      %201 = vsyncadd [#allocation15], %s200
      %s202 = sshll.u32 [#allocation16], 4
      %s203 = int_to_ptr.vmem [resolvable:$true] %s202
      %208 = dma.hbm_to_vmem [thread:$0]  %s43, 256, %s203, [#allocation15], 64, 64, 4
    $region89: #{decoder_rnn_forward.1} parent=1 // pred_fallthru
      _
    // Predicated region
    $region90: #{decoder_rnn_forward.1} parent=1 // pred_check
      _
    $region91: #{decoder_rnn_forward.1} parent=1 // pred_check_branch
      %210 = sbr.rel (0) target = $region93
    $region92: #{decoder_rnn_forward.1} parent=1 // pred_region
      _
    $region93: #{decoder_rnn_forward.1} parent=1 // pred_fallthru
      _
    // Predicated region
    $region94: #{decoder_rnn_forward.1} parent=1 // pred_check
      _
    $region95: #{decoder_rnn_forward.1} parent=1 // pred_check_branch
      %212 = sbr.rel (0) target = $region97
    $region96: #{decoder_rnn_forward.1} parent=1 // pred_region
      %s214 = ssub.s32 16, 16
      %215 = vsyncadd [#allocation18], %s214
      %s217 = sshll.u32 [#allocation17], 4
      %s218 = int_to_ptr.vmem [resolvable:$true] %s217
      %220 = dma.hbm_to_vmem [thread:$0]  %s47, 16, %s218, [#allocation18]
    $region97: #{decoder_rnn_forward.1} parent=1 // pred_fallthru
      _
    // Predicated region
    $region98: #{decoder_rnn_forward.1} parent=1 // pred_check
      _
    $region99: #{decoder_rnn_forward.1} parent=1 // pred_check_branch
      %222 = sbr.rel (0) target = $region101
    $region100: #{decoder_rnn_forward.1} parent=1 // pred_region
      %s224 = ssub.s32 16, 16
      %225 = vsyncadd [#allocation18], %s224
      %s227 = sshll.u32 [#allocation19], 4
      %s228 = int_to_ptr.vmem [resolvable:$true] %s227
      %230 = dma.hbm_to_vmem [thread:$0]  %s49, 16, %s228, [#allocation18]
    $region101: #{decoder_rnn_forward.1} parent=1 // pred_fallthru
      _
    // Predicated region
    $region102: #{decoder_rnn_forward.1} parent=1 // pred_check
      _
    $region103: #{decoder_rnn_forward.1} parent=1 // pred_check_branch
      %232 = sbr.rel (0) target = $region105
    $region104: #{decoder_rnn_forward.1} parent=1 // pred_region
      %s234 = ssub.s32 16, 16
      %235 = vsyncadd [#allocation21], %s234
      %s237 = sshll.u32 [#allocation20], 4
      %s238 = int_to_ptr.vmem [resolvable:$true] %s237
      %240 = dma.hbm_to_vmem [thread:$0]  %s51, 16, %s238, [#allocation21]
    $region105: #{decoder_rnn_forward.1} parent=1 // pred_fallthru
      _
    // Predicated region
    $region106: #{decoder_rnn_forward.1} parent=1 // pred_check
      _
    $region107: #{decoder_rnn_forward.1} parent=1 // pred_check_branch
      %242 = sbr.rel (0) target = $region109
    $region108: #{decoder_rnn_forward.1} parent=1 // pred_region
      %s244 = ssub.s32 32, 32
      %245 = vsyncadd [#allocation21], %s244
      %s247 = sshll.u32 [#allocation22], 4
      %s248 = int_to_ptr.vmem [resolvable:$true] %s247
      %250 = dma.hbm_to_vmem [thread:$0]  %s53, 32, %s248, [#allocation21]
    $region109: #{decoder_rnn_forward.1} parent=1 // pred_fallthru
      _
    // Predicated region
    $region110: #{decoder_rnn_forward.1} parent=1 // pred_check
      _
    $region111: #{decoder_rnn_forward.1} parent=1 // pred_check_branch
      %252 = sbr.rel (0) target = $region113
    $region112: #{decoder_rnn_forward.1} parent=1 // pred_region
      _
    $region113: #{decoder_rnn_forward.1} parent=1 // pred_fallthru
      _
    // Predicated region
    $region114: #{decoder_rnn_forward.1} parent=1 // pred_check
      _
    $region115: #{decoder_rnn_forward.1} parent=1 // pred_check_branch
      %254 = sbr.rel (0) target = $region117
    $region116: #{decoder_rnn_forward.1} parent=1 // pred_region
      _
    $region117: #{decoder_rnn_forward.1} parent=1 // pred_fallthru
      _
    // Predicated region
    $region118: #{decoder_rnn_forward.1} parent=1 // pred_check
      _
    $region119: #{decoder_rnn_forward.1} parent=1 // pred_check_branch
      %256 = sbr.rel (0) target = $region121
    $region120: #{decoder_rnn_forward.1} parent=1 // pred_region
      %s258 = ssub.s32 16, 16
      %259 = vsyncadd [#allocation24], %s258
      %s261 = sshll.u32 [#allocation23], 4
      %s262 = int_to_ptr.vmem [resolvable:$true] %s261
      %264 = dma.hbm_to_vmem [thread:$0]  %s59, 16, %s262, [#allocation24]
    $region121: #{decoder_rnn_forward.1} parent=1 // pred_fallthru
      _
    // Predicated region
    $region122: #{decoder_rnn_forward.1} parent=1 // pred_check
      _
    $region123: #{decoder_rnn_forward.1} parent=1 // pred_check_branch
      %266 = sbr.rel (0) target = $region125
    $region124: #{decoder_rnn_forward.1} parent=1 // pred_region
      %267 = dma.done [#allocation3], 32
    $region125: #{decoder_rnn_forward.1} parent=1 // pred_fallthru
      _
    // Predicated region
    $region126: #{decoder_rnn_forward.1} parent=1 // pred_check
      _
    $region127: #{decoder_rnn_forward.1} parent=1 // pred_check_branch
      %269 = sbr.rel (0) target = $region129
    $region128: #{decoder_rnn_forward.1} parent=1 // pred_region
      %270 = dma.done [#allocation6], 32
    $region129: #{decoder_rnn_forward.1} parent=1 // pred_fallthru
      _
    // Predicated region
    $region130: #{decoder_rnn_forward.1} parent=1 // pred_check
      _
    $region131: #{decoder_rnn_forward.1} parent=1 // pred_check_branch
      %272 = sbr.rel (0) target = $region133
    $region132: #{decoder_rnn_forward.1} parent=1 // pred_region
      %273 = dma.done [#allocation6], 64
    $region133: #{decoder_rnn_forward.1} parent=1 // pred_fallthru
      _
    // Predicated region
    $region134: #{decoder_rnn_forward.1} parent=1 // pred_check
      _
    $region135: #{decoder_rnn_forward.1} parent=1 // pred_check_branch
      %275 = sbr.rel (0) target = $region137
    $region136: #{decoder_rnn_forward.1} parent=1 // pred_region
      %276 = dma.done [#allocation9], 256
    $region137: #{decoder_rnn_forward.1} parent=1 // pred_fallthru
      _
    // Predicated region
    $region138: #{decoder_rnn_forward.1} parent=1 // pred_check
      _
    $region139: #{decoder_rnn_forward.1} parent=1 // pred_check_branch
      %278 = sbr.rel (0) target = $region141
    $region140: #{decoder_rnn_forward.1} parent=1 // pred_region
      %279 = dma.done [#allocation9], 256
    $region141: #{decoder_rnn_forward.1} parent=1 // pred_fallthru
      _
    // Predicated region
    $region142: #{decoder_rnn_forward.1} parent=1 // pred_check
      _
    $region143: #{decoder_rnn_forward.1} parent=1 // pred_check_branch
      %281 = sbr.rel (0) target = $region145
    $region144: #{decoder_rnn_forward.1} parent=1 // pred_region
      %282 = dma.done [#allocation12], 256
    $region145: #{decoder_rnn_forward.1} parent=1 // pred_fallthru
      _
    // Predicated region
    $region146: #{decoder_rnn_forward.1} parent=1 // pred_check
      _
    $region147: #{decoder_rnn_forward.1} parent=1 // pred_check_branch
      %284 = sbr.rel (0) target = $region149
    $region148: #{decoder_rnn_forward.1} parent=1 // pred_region
      %285 = dma.done [#allocation12], 256
    $region149: #{decoder_rnn_forward.1} parent=1 // pred_fallthru
      _
    // Predicated region
    $region150: #{decoder_rnn_forward.1} parent=1 // pred_check
      _
    $region151: #{decoder_rnn_forward.1} parent=1 // pred_check_branch
      %287 = sbr.rel (0) target = $region153
    $region152: #{decoder_rnn_forward.1} parent=1 // pred_region
      %288 = dma.done [#allocation15], 256
    $region153: #{decoder_rnn_forward.1} parent=1 // pred_fallthru
      _
    // Predicated region
    $region154: #{decoder_rnn_forward.1} parent=1 // pred_check
      _
    $region155: #{decoder_rnn_forward.1} parent=1 // pred_check_branch
      %290 = sbr.rel (0) target = $region157
    $region156: #{decoder_rnn_forward.1} parent=1 // pred_region
      %291 = dma.done [#allocation15], 256
    $region157: #{decoder_rnn_forward.1} parent=1 // pred_fallthru
      _
    // Predicated region
    $region158: #{decoder_rnn_forward.1} parent=1 // pred_check
      _
    $region159: #{decoder_rnn_forward.1} parent=1 // pred_check_branch
      %293 = sbr.rel (0) target = $region161
    $region160: #{decoder_rnn_forward.1} parent=1 // pred_region
      %294 = dma.done [#allocation18], 16
    $region161: #{decoder_rnn_forward.1} parent=1 // pred_fallthru
      _
    // Predicated region
    $region162: #{decoder_rnn_forward.1} parent=1 // pred_check
      _
    $region163: #{decoder_rnn_forward.1} parent=1 // pred_check_branch
      %296 = sbr.rel (0) target = $region165
    $region164: #{decoder_rnn_forward.1} parent=1 // pred_region
      %297 = dma.done [#allocation18], 16
    $region165: #{decoder_rnn_forward.1} parent=1 // pred_fallthru
      _
    // Predicated region
    $region166: #{decoder_rnn_forward.1} parent=1 // pred_check
      _
    $region167: #{decoder_rnn_forward.1} parent=1 // pred_check_branch
      %299 = sbr.rel (0) target = $region169
    $region168: #{decoder_rnn_forward.1} parent=1 // pred_region
      %300 = dma.done [#allocation21], 16
    $region169: #{decoder_rnn_forward.1} parent=1 // pred_fallthru
      _
    // Predicated region
    $region170: #{decoder_rnn_forward.1} parent=1 // pred_check
      _
    $region171: #{decoder_rnn_forward.1} parent=1 // pred_check_branch
      %302 = sbr.rel (0) target = $region173
    $region172: #{decoder_rnn_forward.1} parent=1 // pred_region
      %303 = dma.done [#allocation21], 32
    $region173: #{decoder_rnn_forward.1} parent=1 // pred_fallthru
      _
    // Predicated region
    $region174: #{decoder_rnn_forward.1} parent=1 // pred_check
      _
    $region175: #{decoder_rnn_forward.1} parent=1 // pred_check_branch
      %305 = sbr.rel (0) target = $region177
    $region176: #{decoder_rnn_forward.1} parent=1 // pred_region
      %306 = dma.done [#allocation24], 16
    $region177: #{decoder_rnn_forward.1} parent=1 // pred_fallthru
      _
    %v308 = vld [vmem:[#allocation2] sm:$0x3]
    %v309 = vpack.c.bf16 %v308, %v308
    %v310 = vld [vmem:[#allocation5] sm:$0x3]
    %v311 = vpack.c.bf16 %v310, %v310
    %v312 = vld [vmem:[#allocation7] sm:$0x3]
    %v313 = vpack.c.bf16 %v312, %v312
    %v314 = vld [vmem:[%s7] sm:$0x3]
    %v315 = vld [vmem:[%s13] sm:$0xf]
    %v316 = vld [vmem:[%s13 + $0x4] sm:$0xf]
    %v317 = vld [vmem:[%s13 + $0x8] sm:$0xf]
    %v318 = vld [vmem:[%s13 + $0xc] sm:$0xf]
    %v323 = vunpack.c.l.b16 %v315
    %v324 = vunpack.c.l.b16 %v316
    %v325 = vunpack.c.l.b16 %v317
    %v326 = vunpack.c.l.b16 %v318
    %v327 = vpack.c.b16 %v324, %v323
    %v328 = vpack.c.b16 %v326, %v325
    %vm331 = vcmask 261120
    %v333 = vsel %vm331, %v311, 0
    %335 = vmatprep.subr.bf16.mxu0 0
    %336 = vmatpush1.bf16.msra.mxu0 %v327
    %337 = vmatprep.subr.bf16.mxu0 0
    %338 = vmatpush1.bf16.msra.mxu0 %v328
    %339 = vmatprep.subr.bf16.mxu0 0
    %340 = vmatpush1.bf16.msra.mxu0 0
    %341 = vmatprep.subr.bf16.mxu0 0
    %342 = vmatpush1.bf16.msra.mxu0 0
    %343 = vmatprep.subr.bf16.mxu0 0
    %344 = vmatpush1.bf16.msra.mxu0 0
    %345 = vmatprep.subr.bf16.mxu0 0
    %346 = vmatpush1.bf16.msra.mxu0 0
    %347 = vmatprep.subr.bf16.mxu0 0
    %348 = vmatpush1.bf16.msra.mxu0 0
    %349 = vmatprep.subr.bf16.mxu0 0
    %350 = vmatpush1.bf16.msra.mxu0 0
    %351 = vmatprep.subr.bf16.mxu0 0
    %352 = vmatpush1.bf16.msra.mxu0 0
    %353 = vmatprep.subr.bf16.mxu0 0
    %354 = vmatpush1.bf16.msra.mxu0 0
    %355 = vmatprep.subr.bf16.mxu0 0
    %356 = vmatpush1.bf16.msra.mxu0 0
    %357 = vmatprep.subr.bf16.mxu0 0
    %358 = vmatpush1.bf16.msra.mxu0 0
    %359 = vmatprep.subr.bf16.mxu0 0
    %360 = vmatpush1.bf16.msra.mxu0 0
    %361 = vmatprep.subr.bf16.mxu0 0
    %362 = vmatpush1.bf16.msra.mxu0 0
    %363 = vmatprep.subr.bf16.mxu0 0
    %364 = vmatpush1.bf16.msra.mxu0 0
    %365 = vmatprep.subr.bf16.mxu0 0
    %366 = vmatpush1.bf16.msra.mxu0 0
    %367 = vmatprep.mubr.bf16.mxu0 0
    %368 = vmatmul.mubr.bf16.gmra.mrb[0].mxu0 %v333
    %v369 = vpop.f32.mrb[0].mxu0
    %v370 = vadd.f32 0.0, %v369
    %v371 = vpop.f32.mrb[0].mxu0
    %v372 = vpop.f32.mrb[0].mxu0
    %v373 = vpop.f32.mrb[0].mxu0
    %374 = vdwg.mxu0
    %vm375 = vcmask 31744
    %v377 = vsel %vm375, %v309, 0
    %vm379 = vcmask 1041408
    %v381 = vsel %vm379, %v314, 0
    %383 = vmatprep.subr.bf16.mxu0 0
    %384 = vmatpush1.bf16.msra.mxu0 %v381
    %385 = vmatprep.subr.bf16.mxu0 0
    %386 = vmatpush1.bf16.msra.mxu0 0
    %387 = vmatprep.subr.bf16.mxu0 0
    %388 = vmatpush1.bf16.msra.mxu0 0
    %389 = vmatprep.subr.bf16.mxu0 0
    %390 = vmatpush1.bf16.msra.mxu0 0
    %391 = vmatprep.subr.bf16.mxu0 0
    %392 = vmatpush1.bf16.msra.mxu0 0
    %393 = vmatprep.subr.bf16.mxu0 0
    %394 = vmatpush1.bf16.msra.mxu0 0
    %395 = vmatprep.subr.bf16.mxu0 0
    %396 = vmatpush1.bf16.msra.mxu0 0
    %397 = vmatprep.subr.bf16.mxu0 0
    %398 = vmatpush1.bf16.msra.mxu0 0
    %399 = vmatprep.subr.bf16.mxu0 0
    %400 = vmatpush1.bf16.msra.mxu0 0
    %401 = vmatprep.subr.bf16.mxu0 0
    %402 = vmatpush1.bf16.msra.mxu0 0
    %403 = vmatprep.subr.bf16.mxu0 0
    %404 = vmatpush1.bf16.msra.mxu0 0
    %405 = vmatprep.subr.bf16.mxu0 0
    %406 = vmatpush1.bf16.msra.mxu0 0
    %407 = vmatprep.subr.bf16.mxu0 0
    %408 = vmatpush1.bf16.msra.mxu0 0
    %409 = vmatprep.subr.bf16.mxu0 0
    %410 = vmatpush1.bf16.msra.mxu0 0
    %411 = vmatprep.subr.bf16.mxu0 0
    %412 = vmatpush1.bf16.msra.mxu0 0
    %413 = vmatprep.subr.bf16.mxu0 0
    %414 = vmatpush1.bf16.msra.mxu0 0
    %415 = vmatprep.mubr.bf16.mxu0 0
    %416 = vmatmul.mubr.bf16.gmra.mrb[0].mxu0 %v377
    %v417 = vpop.f32.mrb[0].mxu0
    %v418 = vadd.f32 %v370, %v417
    %v419 = vpop.f32.mrb[0].mxu0
    %v420 = vpop.f32.mrb[0].mxu0
    %v421 = vpop.f32.mrb[0].mxu0
    %422 = vdwg.mxu0
    %v423 = vld [vmem:[%s9] sm:$0x3]
    %v424 = vld [vmem:[%s15] sm:$0xf]
    %v425 = vld [vmem:[%s15 + $0x4] sm:$0xf]
    %v426 = vld [vmem:[%s15 + $0x8] sm:$0xf]
    %v427 = vld [vmem:[%s15 + $0xc] sm:$0xf]
    %v432 = vunpack.c.l.b16 %v424
    %v433 = vunpack.c.l.b16 %v425
    %v434 = vunpack.c.l.b16 %v426
    %v435 = vunpack.c.l.b16 %v427
    %v436 = vpack.c.b16 %v433, %v432
    %v437 = vpack.c.b16 %v435, %v434
    %440 = vmatprep.subr.bf16.mxu0 0
    %441 = vmatpush1.bf16.msra.mxu0 %v436
    %442 = vmatprep.subr.bf16.mxu0 0
    %443 = vmatpush1.bf16.msra.mxu0 %v437
    %444 = vmatprep.subr.bf16.mxu0 0
    %445 = vmatpush1.bf16.msra.mxu0 0
    %446 = vmatprep.subr.bf16.mxu0 0
    %447 = vmatpush1.bf16.msra.mxu0 0
    %448 = vmatprep.subr.bf16.mxu0 0
    %449 = vmatpush1.bf16.msra.mxu0 0
    %450 = vmatprep.subr.bf16.mxu0 0
    %451 = vmatpush1.bf16.msra.mxu0 0
    %452 = vmatprep.subr.bf16.mxu0 0
    %453 = vmatpush1.bf16.msra.mxu0 0
    %454 = vmatprep.subr.bf16.mxu0 0
    %455 = vmatpush1.bf16.msra.mxu0 0
    %456 = vmatprep.subr.bf16.mxu0 0
    %457 = vmatpush1.bf16.msra.mxu0 0
    %458 = vmatprep.subr.bf16.mxu0 0
    %459 = vmatpush1.bf16.msra.mxu0 0
    %460 = vmatprep.subr.bf16.mxu0 0
    %461 = vmatpush1.bf16.msra.mxu0 0
    %462 = vmatprep.subr.bf16.mxu0 0
    %463 = vmatpush1.bf16.msra.mxu0 0
    %464 = vmatprep.subr.bf16.mxu0 0
    %465 = vmatpush1.bf16.msra.mxu0 0
    %466 = vmatprep.subr.bf16.mxu0 0
    %467 = vmatpush1.bf16.msra.mxu0 0
    %468 = vmatprep.subr.bf16.mxu0 0
    %469 = vmatpush1.bf16.msra.mxu0 0
    %470 = vmatprep.subr.bf16.mxu0 0
    %471 = vmatpush1.bf16.msra.mxu0 0
    %472 = vmatprep.mubr.bf16.mxu0 0
    %473 = vmatmul.mubr.bf16.gmra.mrb[0].mxu0 %v333
    %v474 = vpop.f32.mrb[0].mxu0
    %v475 = vadd.f32 0.0, %v474
    %v476 = vpop.f32.mrb[0].mxu0
    %v477 = vpop.f32.mrb[0].mxu0
    %v478 = vpop.f32.mrb[0].mxu0
    %479 = vdwg.mxu0
    %v481 = vsel %vm379, %v423, 0
    %483 = vmatprep.subr.bf16.mxu0 0
    %484 = vmatpush1.bf16.msra.mxu0 %v481
    %485 = vmatprep.subr.bf16.mxu0 0
    %486 = vmatpush1.bf16.msra.mxu0 0
    %487 = vmatprep.subr.bf16.mxu0 0
    %488 = vmatpush1.bf16.msra.mxu0 0
    %489 = vmatprep.subr.bf16.mxu0 0
    %490 = vmatpush1.bf16.msra.mxu0 0
    %491 = vmatprep.subr.bf16.mxu0 0
    %492 = vmatpush1.bf16.msra.mxu0 0
    %493 = vmatprep.subr.bf16.mxu0 0
    %494 = vmatpush1.bf16.msra.mxu0 0
    %495 = vmatprep.subr.bf16.mxu0 0
    %496 = vmatpush1.bf16.msra.mxu0 0
    %497 = vmatprep.subr.bf16.mxu0 0
    %498 = vmatpush1.bf16.msra.mxu0 0
    %499 = vmatprep.subr.bf16.mxu0 0
    %500 = vmatpush1.bf16.msra.mxu0 0
    %501 = vmatprep.subr.bf16.mxu0 0
    %502 = vmatpush1.bf16.msra.mxu0 0
    %503 = vmatprep.subr.bf16.mxu0 0
    %504 = vmatpush1.bf16.msra.mxu0 0
    %505 = vmatprep.subr.bf16.mxu0 0
    %506 = vmatpush1.bf16.msra.mxu0 0
    %507 = vmatprep.subr.bf16.mxu0 0
    %508 = vmatpush1.bf16.msra.mxu0 0
    %509 = vmatprep.subr.bf16.mxu0 0
    %510 = vmatpush1.bf16.msra.mxu0 0
    %511 = vmatprep.subr.bf16.mxu0 0
    %512 = vmatpush1.bf16.msra.mxu0 0
    %513 = vmatprep.subr.bf16.mxu0 0
    %514 = vmatpush1.bf16.msra.mxu0 0
    %515 = vmatprep.mubr.bf16.mxu0 0
    %516 = vmatmul.mubr.bf16.gmra.mrb[0].mxu0 %v377
    %v517 = vpop.f32.mrb[0].mxu0
    %v518 = vadd.f32 %v475, %v517
    %v519 = vpop.f32.mrb[0].mxu0
    %v520 = vpop.f32.mrb[0].mxu0
    %v521 = vpop.f32.mrb[0].mxu0
    %522 = vdwg.mxu0
    %v523 = vld [vmem:[%s11] sm:$0x3]
    %v524 = vld [vmem:[%s17] sm:$0xf]
    %v525 = vld [vmem:[%s17 + $0x4] sm:$0xf]
    %v526 = vld [vmem:[%s17 + $0x8] sm:$0xf]
    %v527 = vld [vmem:[%s17 + $0xc] sm:$0xf]
    %v532 = vunpack.c.l.b16 %v524
    %v533 = vunpack.c.l.b16 %v525
    %v534 = vunpack.c.l.b16 %v526
    %v535 = vunpack.c.l.b16 %v527
    %v536 = vpack.c.b16 %v533, %v532
    %v537 = vpack.c.b16 %v535, %v534
    %540 = vmatprep.subr.bf16.mxu0 0
    %541 = vmatpush1.bf16.msra.mxu0 %v536
    %542 = vmatprep.subr.bf16.mxu0 0
    %543 = vmatpush1.bf16.msra.mxu0 %v537
    %544 = vmatprep.subr.bf16.mxu0 0
    %545 = vmatpush1.bf16.msra.mxu0 0
    %546 = vmatprep.subr.bf16.mxu0 0
    %547 = vmatpush1.bf16.msra.mxu0 0
    %548 = vmatprep.subr.bf16.mxu0 0
    %549 = vmatpush1.bf16.msra.mxu0 0
    %550 = vmatprep.subr.bf16.mxu0 0
    %551 = vmatpush1.bf16.msra.mxu0 0
    %552 = vmatprep.subr.bf16.mxu0 0
    %553 = vmatpush1.bf16.msra.mxu0 0
    %554 = vmatprep.subr.bf16.mxu0 0
    %555 = vmatpush1.bf16.msra.mxu0 0
    %556 = vmatprep.subr.bf16.mxu0 0
    %557 = vmatpush1.bf16.msra.mxu0 0
    %558 = vmatprep.subr.bf16.mxu0 0
    %559 = vmatpush1.bf16.msra.mxu0 0
    %560 = vmatprep.subr.bf16.mxu0 0
    %561 = vmatpush1.bf16.msra.mxu0 0
    %562 = vmatprep.subr.bf16.mxu0 0
    %563 = vmatpush1.bf16.msra.mxu0 0
    %564 = vmatprep.subr.bf16.mxu0 0
    %565 = vmatpush1.bf16.msra.mxu0 0
    %566 = vmatprep.subr.bf16.mxu0 0
    %567 = vmatpush1.bf16.msra.mxu0 0
    %568 = vmatprep.subr.bf16.mxu0 0
    %569 = vmatpush1.bf16.msra.mxu0 0
    %570 = vmatprep.subr.bf16.mxu0 0
    %571 = vmatpush1.bf16.msra.mxu0 0
    %572 = vmatprep.mubr.bf16.mxu0 0
    %573 = vmatmul.mubr.bf16.gmra.mrb[0].mxu0 %v333
    %v574 = vpop.f32.mrb[0].mxu0
    %v575 = vadd.f32 0.0, %v574
    %v576 = vpop.f32.mrb[0].mxu0
    %v577 = vpop.f32.mrb[0].mxu0
    %v578 = vpop.f32.mrb[0].mxu0
    %579 = vdwg.mxu0
    %v581 = vsel %vm379, %v523, 0
    %583 = vmatprep.subr.bf16.mxu0 0
    %584 = vmatpush1.bf16.msra.mxu0 %v581
    %585 = vmatprep.subr.bf16.mxu0 0
    %586 = vmatpush1.bf16.msra.mxu0 0
    %587 = vmatprep.subr.bf16.mxu0 0
    %588 = vmatpush1.bf16.msra.mxu0 0
    %589 = vmatprep.subr.bf16.mxu0 0
    %590 = vmatpush1.bf16.msra.mxu0 0
    %591 = vmatprep.subr.bf16.mxu0 0
    %592 = vmatpush1.bf16.msra.mxu0 0
    %593 = vmatprep.subr.bf16.mxu0 0
    %594 = vmatpush1.bf16.msra.mxu0 0
    %595 = vmatprep.subr.bf16.mxu0 0
    %596 = vmatpush1.bf16.msra.mxu0 0
    %597 = vmatprep.subr.bf16.mxu0 0
    %598 = vmatpush1.bf16.msra.mxu0 0
    %599 = vmatprep.subr.bf16.mxu0 0
    %600 = vmatpush1.bf16.msra.mxu0 0
    %601 = vmatprep.subr.bf16.mxu0 0
    %602 = vmatpush1.bf16.msra.mxu0 0
    %603 = vmatprep.subr.bf16.mxu0 0
    %604 = vmatpush1.bf16.msra.mxu0 0
    %605 = vmatprep.subr.bf16.mxu0 0
    %606 = vmatpush1.bf16.msra.mxu0 0
    %607 = vmatprep.subr.bf16.mxu0 0
    %608 = vmatpush1.bf16.msra.mxu0 0
    %609 = vmatprep.subr.bf16.mxu0 0
    %610 = vmatpush1.bf16.msra.mxu0 0
    %611 = vmatprep.subr.bf16.mxu0 0
    %612 = vmatpush1.bf16.msra.mxu0 0
    %613 = vmatprep.subr.bf16.mxu0 0
    %614 = vmatpush1.bf16.msra.mxu0 0
    %615 = vmatprep.mubr.bf16.mxu0 0
    %616 = vmatmul.mubr.bf16.gmra.mrb[0].mxu0 %v377
    %v617 = vpop.f32.mrb[0].mxu0
    %v618 = vadd.f32 %v575, %v617
    %v619 = vpop.f32.mrb[0].mxu0
    %v620 = vpop.f32.mrb[0].mxu0
    %v621 = vpop.f32.mrb[0].mxu0
    %622 = vdwg.mxu0
    %v623 = vld [vmem:[%s19] sm:$0xf]
    %v624 = vld [vmem:[%s19 + $0x4] sm:$0xf]
    %v625 = vld [vmem:[%s19 + $0x8] sm:$0xf]
    %v626 = vld [vmem:[%s19 + $0xc] sm:$0xf]
    %v631 = vunpack.c.l.b16 %v623
    %v632 = vunpack.c.l.b16 %v624
    %v633 = vunpack.c.l.b16 %v625
    %v634 = vunpack.c.l.b16 %v626
    %v635 = vpack.c.b16 %v632, %v631
    %v636 = vpack.c.b16 %v634, %v633
    %v640 = vsel %vm331, %v313, 0
    %642 = vmatprep.subr.bf16.mxu0 0
    %643 = vmatpush1.bf16.msra.mxu0 %v635
    %644 = vmatprep.subr.bf16.mxu0 0
    %645 = vmatpush1.bf16.msra.mxu0 %v636
    %646 = vmatprep.subr.bf16.mxu0 0
    %647 = vmatpush1.bf16.msra.mxu0 0
    %648 = vmatprep.subr.bf16.mxu0 0
    %649 = vmatpush1.bf16.msra.mxu0 0
    %650 = vmatprep.subr.bf16.mxu0 0
    %651 = vmatpush1.bf16.msra.mxu0 0
    %652 = vmatprep.subr.bf16.mxu0 0
    %653 = vmatpush1.bf16.msra.mxu0 0
    %654 = vmatprep.subr.bf16.mxu0 0
    %655 = vmatpush1.bf16.msra.mxu0 0
    %656 = vmatprep.subr.bf16.mxu0 0
    %657 = vmatpush1.bf16.msra.mxu0 0
    %658 = vmatprep.subr.bf16.mxu0 0
    %659 = vmatpush1.bf16.msra.mxu0 0
    %660 = vmatprep.subr.bf16.mxu0 0
    %661 = vmatpush1.bf16.msra.mxu0 0
    %662 = vmatprep.subr.bf16.mxu0 0
    %663 = vmatpush1.bf16.msra.mxu0 0
    %664 = vmatprep.subr.bf16.mxu0 0
    %665 = vmatpush1.bf16.msra.mxu0 0
    %666 = vmatprep.subr.bf16.mxu0 0
    %667 = vmatpush1.bf16.msra.mxu0 0
    %668 = vmatprep.subr.bf16.mxu0 0
    %669 = vmatpush1.bf16.msra.mxu0 0
    %670 = vmatprep.subr.bf16.mxu0 0
    %671 = vmatpush1.bf16.msra.mxu0 0
    %672 = vmatprep.subr.bf16.mxu0 0
    %673 = vmatpush1.bf16.msra.mxu0 0
    %674 = vmatprep.mubr.bf16.mxu0 0
    %675 = vmatmul.mubr.bf16.gmra.mrb[0].mxu0 %v640
    %v676 = vpop.f32.mrb[0].mxu0
    %v677 = vadd.f32 0.0, %v676
    %v678 = vpop.f32.mrb[0].mxu0
    %v679 = vpop.f32.mrb[0].mxu0
    %v680 = vpop.f32.mrb[0].mxu0
    %681 = vdwg.mxu0
    %v682 = vld [vmem:[%s21] sm:$0xf]
    %v683 = vld [vmem:[%s21 + $0x4] sm:$0xf]
    %v684 = vld [vmem:[%s21 + $0x8] sm:$0xf]
    %v685 = vld [vmem:[%s21 + $0xc] sm:$0xf]
    %v690 = vunpack.c.l.b16 %v682
    %v691 = vunpack.c.l.b16 %v683
    %v692 = vunpack.c.l.b16 %v684
    %v693 = vunpack.c.l.b16 %v685
    %v694 = vpack.c.b16 %v691, %v690
    %v695 = vpack.c.b16 %v693, %v692
    %698 = vmatprep.subr.bf16.mxu0 0
    %699 = vmatpush1.bf16.msra.mxu0 %v694
    %700 = vmatprep.subr.bf16.mxu0 0
    %701 = vmatpush1.bf16.msra.mxu0 %v695
    %702 = vmatprep.subr.bf16.mxu0 0
    %703 = vmatpush1.bf16.msra.mxu0 0
    %704 = vmatprep.subr.bf16.mxu0 0
    %705 = vmatpush1.bf16.msra.mxu0 0
    %706 = vmatprep.subr.bf16.mxu0 0
    %707 = vmatpush1.bf16.msra.mxu0 0
    %708 = vmatprep.subr.bf16.mxu0 0
    %709 = vmatpush1.bf16.msra.mxu0 0
    %710 = vmatprep.subr.bf16.mxu0 0
    %711 = vmatpush1.bf16.msra.mxu0 0
    %712 = vmatprep.subr.bf16.mxu0 0
    %713 = vmatpush1.bf16.msra.mxu0 0
    %714 = vmatprep.subr.bf16.mxu0 0
    %715 = vmatpush1.bf16.msra.mxu0 0
    %716 = vmatprep.subr.bf16.mxu0 0
    %717 = vmatpush1.bf16.msra.mxu0 0
    %718 = vmatprep.subr.bf16.mxu0 0
    %719 = vmatpush1.bf16.msra.mxu0 0
    %720 = vmatprep.subr.bf16.mxu0 0
    %721 = vmatpush1.bf16.msra.mxu0 0
    %722 = vmatprep.subr.bf16.mxu0 0
    %723 = vmatpush1.bf16.msra.mxu0 0
    %724 = vmatprep.subr.bf16.mxu0 0
    %725 = vmatpush1.bf16.msra.mxu0 0
    %726 = vmatprep.subr.bf16.mxu0 0
    %727 = vmatpush1.bf16.msra.mxu0 0
    %728 = vmatprep.subr.bf16.mxu0 0
    %729 = vmatpush1.bf16.msra.mxu0 0
    %730 = vmatprep.mubr.bf16.mxu0 0
    %731 = vmatmul.mubr.bf16.gmra.mrb[0].mxu0 %v640
    %v732 = vpop.f32.mrb[0].mxu0
    %v733 = vadd.f32 0.0, %v732
    %v734 = vpop.f32.mrb[0].mxu0
    %v735 = vpop.f32.mrb[0].mxu0
    %v736 = vpop.f32.mrb[0].mxu0
    %737 = vdwg.mxu0
    %v738 = vld [vmem:[%s23] sm:$0xf]
    %v739 = vld [vmem:[%s23 + $0x4] sm:$0xf]
    %v740 = vld [vmem:[%s23 + $0x8] sm:$0xf]
    %v741 = vld [vmem:[%s23 + $0xc] sm:$0xf]
    %v742 = vadd.f32 %v418, %v677
    %v743 = vld [vmem:[%s25] sm:$0x1]
    %v745 = vlaneseq
    %v746 = vshrl.u32 %v745, 7
    %v747 = vsub.s32 0, %v746
    %v748 = vrot.slane %v743, %v747
    %v750 = vadd.f32 %v742, %v748
    %v751 = vxor.u32 %v750, 2147483648
    %v752 = vmul.f32 %v751, 1.442695
    %v753 = vpow.pop %v752
    %v754 = vadd.f32 %v753, 1.0
    %v755 = vrcp.pop %v754
    %v756 = vmul.f32 1.0, %v755
    %v757 = vadd.f32 %v518, %v733
    %v758 = vld [vmem:[%s27] sm:$0x1]
    %v760 = vlaneseq
    %v761 = vshrl.u32 %v760, 7
    %v762 = vsub.s32 0, %v761
    %v763 = vrot.slane %v758, %v762
    %v765 = vadd.f32 %v757, %v763
    %v766 = vxor.u32 %v765, 2147483648
    %v767 = vmul.f32 %v766, 1.442695
    %v768 = vpow.pop %v767
    %v769 = vadd.f32 %v768, 1.0
    %v770 = vrcp.pop %v769
    %v771 = vmul.f32 1.0, %v770
    %v772 = vld [vmem:[%s29] sm:$0x1]
    %v774 = vlaneseq
    %v775 = vshrl.u32 %v774, 7
    %v776 = vsub.s32 0, %v775
    %v777 = vrot.slane %v772, %v776
    %v779 = vadd.f32 %v618, %v777
    %v780 = vld [vmem:[%s31] sm:$0x1]
    %v782 = vlaneseq
    %v783 = vshrl.u32 %v782, 7
    %v784 = vsub.s32 0, %v783
    %v785 = vrot.slane %v780, %v784
    %v791 = vunpack.c.l.b16 %v738
    %v792 = vunpack.c.l.b16 %v739
    %v793 = vunpack.c.l.b16 %v740
    %v794 = vunpack.c.l.b16 %v741
    %v795 = vpack.c.b16 %v792, %v791
    %v796 = vpack.c.b16 %v794, %v793
    %799 = vmatprep.subr.bf16.mxu0 0
    %800 = vmatpush1.bf16.msra.mxu0 %v795
    %801 = vmatprep.subr.bf16.mxu0 0
    %802 = vmatpush1.bf16.msra.mxu0 %v796
    %803 = vmatprep.subr.bf16.mxu0 0
    %804 = vmatpush1.bf16.msra.mxu0 0
    %805 = vmatprep.subr.bf16.mxu0 0
    %806 = vmatpush1.bf16.msra.mxu0 0
    %807 = vmatprep.subr.bf16.mxu0 0
    %808 = vmatpush1.bf16.msra.mxu0 0
    %809 = vmatprep.subr.bf16.mxu0 0
    %810 = vmatpush1.bf16.msra.mxu0 0
    %811 = vmatprep.subr.bf16.mxu0 0
    %812 = vmatpush1.bf16.msra.mxu0 0
    %813 = vmatprep.subr.bf16.mxu0 0
    %814 = vmatpush1.bf16.msra.mxu0 0
    %815 = vmatprep.subr.bf16.mxu0 0
    %816 = vmatpush1.bf16.msra.mxu0 0
    %817 = vmatprep.subr.bf16.mxu0 0
    %818 = vmatpush1.bf16.msra.mxu0 0
    %819 = vmatprep.subr.bf16.mxu0 0
    %820 = vmatpush1.bf16.msra.mxu0 0
    %821 = vmatprep.subr.bf16.mxu0 0
    %822 = vmatpush1.bf16.msra.mxu0 0
    %823 = vmatprep.subr.bf16.mxu0 0
    %824 = vmatpush1.bf16.msra.mxu0 0
    %825 = vmatprep.subr.bf16.mxu0 0
    %826 = vmatpush1.bf16.msra.mxu0 0
    %827 = vmatprep.subr.bf16.mxu0 0
    %828 = vmatpush1.bf16.msra.mxu0 0
    %829 = vmatprep.subr.bf16.mxu0 0
    %830 = vmatpush1.bf16.msra.mxu0 0
    %831 = vmatprep.mubr.bf16.mxu0 0
    %832 = vmatmul.mubr.bf16.gmra.mrb[0].mxu0 %v640
    %v833 = vpop.f32.mrb[0].mxu0
    %v834 = vadd.f32 %v785, %v833
    %v835 = vpop.f32.mrb[0].mxu0
    %v836 = vpop.f32.mrb[0].mxu0
    %v837 = vpop.f32.mrb[0].mxu0
    %838 = vdwg.mxu0
    %v839 = vmul.f32 %v756, %v834
    %v840 = vadd.f32 %v779, %v839
    %v841 = vtanh.pop %v840
    %v842 = vsub.f32 1.0, %v771
    %v843 = vmul.f32 %v842, %v841
    %v844 = vmul.f32 %v771, %v312
    %v845 = vadd.f32 %v843, %v844
    %vm846 = vcmask 254976
    %847 = vst.msk [vmem:[#allocation26] sm:$0x3] %vm846, %v845
    %v848 = vpack.c.bf16 %v845, %v845
    %s849 = scalar_lea.vmem [#allocation7], 2
    %v850 = vld [vmem:[%s849] sm:$0x3]
    %v851 = vpack.c.bf16 %v850, %v850
    %v852 = vld [vmem:[#allocation8] sm:$0xf]
    %v853 = vld [vmem:[#allocation8 + $0x4] sm:$0xf]
    %v854 = vld [vmem:[#allocation8 + $0x8] sm:$0xf]
    %v855 = vld [vmem:[#allocation8 + $0xc] sm:$0xf]
    %v856 = vld [vmem:[#allocation10] sm:$0xf]
    %v857 = vld [vmem:[#allocation10 + $0x4] sm:$0xf]
    %v858 = vld [vmem:[#allocation10 + $0x8] sm:$0xf]
    %v859 = vld [vmem:[#allocation10 + $0xc] sm:$0xf]
    %v860 = vld [vmem:[#allocation11] sm:$0xf]
    %v861 = vld [vmem:[#allocation11 + $0x4] sm:$0xf]
    %v862 = vld [vmem:[#allocation11 + $0x8] sm:$0xf]
    %v863 = vld [vmem:[#allocation11 + $0xc] sm:$0xf]
    %v864 = vld [vmem:[#allocation13] sm:$0xf]
    %v865 = vld [vmem:[#allocation13 + $0x4] sm:$0xf]
    %v866 = vld [vmem:[#allocation13 + $0x8] sm:$0xf]
    %v867 = vld [vmem:[#allocation13 + $0xc] sm:$0xf]
    %v872 = vunpack.c.l.b16 %v864
    %v873 = vunpack.c.l.b16 %v865
    %v874 = vunpack.c.l.b16 %v866
    %v875 = vunpack.c.l.b16 %v867
    %v876 = vpack.c.b16 %v873, %v872
    %v877 = vpack.c.b16 %v875, %v874
    %v881 = vsel %vm331, %v851, 0
    %883 = vmatprep.subr.bf16.mxu0 0
    %884 = vmatpush1.bf16.msra.mxu0 %v876
    %885 = vmatprep.subr.bf16.mxu0 0
    %886 = vmatpush1.bf16.msra.mxu0 %v877
    %887 = vmatprep.subr.bf16.mxu0 0
    %888 = vmatpush1.bf16.msra.mxu0 0
    %889 = vmatprep.subr.bf16.mxu0 0
    %890 = vmatpush1.bf16.msra.mxu0 0
    %891 = vmatprep.subr.bf16.mxu0 0
    %892 = vmatpush1.bf16.msra.mxu0 0
    %893 = vmatprep.subr.bf16.mxu0 0
    %894 = vmatpush1.bf16.msra.mxu0 0
    %895 = vmatprep.subr.bf16.mxu0 0
    %896 = vmatpush1.bf16.msra.mxu0 0
    %897 = vmatprep.subr.bf16.mxu0 0
    %898 = vmatpush1.bf16.msra.mxu0 0
    %899 = vmatprep.subr.bf16.mxu0 0
    %900 = vmatpush1.bf16.msra.mxu0 0
    %901 = vmatprep.subr.bf16.mxu0 0
    %902 = vmatpush1.bf16.msra.mxu0 0
    %903 = vmatprep.subr.bf16.mxu0 0
    %904 = vmatpush1.bf16.msra.mxu0 0
    %905 = vmatprep.subr.bf16.mxu0 0
    %906 = vmatpush1.bf16.msra.mxu0 0
    %907 = vmatprep.subr.bf16.mxu0 0
    %908 = vmatpush1.bf16.msra.mxu0 0
    %909 = vmatprep.subr.bf16.mxu0 0
    %910 = vmatpush1.bf16.msra.mxu0 0
    %911 = vmatprep.subr.bf16.mxu0 0
    %912 = vmatpush1.bf16.msra.mxu0 0
    %913 = vmatprep.subr.bf16.mxu0 0
    %914 = vmatpush1.bf16.msra.mxu0 0
    %915 = vmatprep.mubr.bf16.mxu0 0
    %916 = vmatmul.mubr.bf16.gmra.mrb[0].mxu0 %v881
    %v917 = vpop.f32.mrb[0].mxu0
    %v918 = vadd.f32 0.0, %v917
    %v919 = vpop.f32.mrb[0].mxu0
    %v920 = vpop.f32.mrb[0].mxu0
    %v921 = vpop.f32.mrb[0].mxu0
    %922 = vdwg.mxu0
    %v923 = vld [vmem:[#allocation14] sm:$0xf]
    %v924 = vld [vmem:[#allocation14 + $0x4] sm:$0xf]
    %v925 = vld [vmem:[#allocation14 + $0x8] sm:$0xf]
    %v926 = vld [vmem:[#allocation14 + $0xc] sm:$0xf]
    %v931 = vunpack.c.l.b16 %v923
    %v932 = vunpack.c.l.b16 %v924
    %v933 = vunpack.c.l.b16 %v925
    %v934 = vunpack.c.l.b16 %v926
    %v935 = vpack.c.b16 %v932, %v931
    %v936 = vpack.c.b16 %v934, %v933
    %939 = vmatprep.subr.bf16.mxu0 0
    %940 = vmatpush1.bf16.msra.mxu0 %v935
    %941 = vmatprep.subr.bf16.mxu0 0
    %942 = vmatpush1.bf16.msra.mxu0 %v936
    %943 = vmatprep.subr.bf16.mxu0 0
    %944 = vmatpush1.bf16.msra.mxu0 0
    %945 = vmatprep.subr.bf16.mxu0 0
    %946 = vmatpush1.bf16.msra.mxu0 0
    %947 = vmatprep.subr.bf16.mxu0 0
    %948 = vmatpush1.bf16.msra.mxu0 0
    %949 = vmatprep.subr.bf16.mxu0 0
    %950 = vmatpush1.bf16.msra.mxu0 0
    %951 = vmatprep.subr.bf16.mxu0 0
    %952 = vmatpush1.bf16.msra.mxu0 0
    %953 = vmatprep.subr.bf16.mxu0 0
    %954 = vmatpush1.bf16.msra.mxu0 0
    %955 = vmatprep.subr.bf16.mxu0 0
    %956 = vmatpush1.bf16.msra.mxu0 0
    %957 = vmatprep.subr.bf16.mxu0 0
    %958 = vmatpush1.bf16.msra.mxu0 0
    %959 = vmatprep.subr.bf16.mxu0 0
    %960 = vmatpush1.bf16.msra.mxu0 0
    %961 = vmatprep.subr.bf16.mxu0 0
    %962 = vmatpush1.bf16.msra.mxu0 0
    %963 = vmatprep.subr.bf16.mxu0 0
    %964 = vmatpush1.bf16.msra.mxu0 0
    %965 = vmatprep.subr.bf16.mxu0 0
    %966 = vmatpush1.bf16.msra.mxu0 0
    %967 = vmatprep.subr.bf16.mxu0 0
    %968 = vmatpush1.bf16.msra.mxu0 0
    %969 = vmatprep.subr.bf16.mxu0 0
    %970 = vmatpush1.bf16.msra.mxu0 0
    %971 = vmatprep.mubr.bf16.mxu0 0
    %972 = vmatmul.mubr.bf16.gmra.mrb[0].mxu0 %v881
    %v973 = vpop.f32.mrb[0].mxu0
    %v974 = vadd.f32 0.0, %v973
    %v975 = vpop.f32.mrb[0].mxu0
    %v976 = vpop.f32.mrb[0].mxu0
    %v977 = vpop.f32.mrb[0].mxu0
    %978 = vdwg.mxu0
    %v979 = vld [vmem:[#allocation16] sm:$0xf]
    %v980 = vld [vmem:[#allocation16 + $0x4] sm:$0xf]
    %v981 = vld [vmem:[#allocation16 + $0x8] sm:$0xf]
    %v982 = vld [vmem:[#allocation16 + $0xc] sm:$0xf]
    %v987 = vunpack.c.l.b16 %v852
    %v988 = vunpack.c.l.b16 %v853
    %v989 = vunpack.c.l.b16 %v854
    %v990 = vunpack.c.l.b16 %v855
    %v991 = vpack.c.b16 %v988, %v987
    %v992 = vpack.c.b16 %v990, %v989
    %v996 = vsel %vm331, %v848, 0
    %998 = vmatprep.subr.bf16.mxu0 0
    %999 = vmatpush1.bf16.msra.mxu0 %v991
    %1000 = vmatprep.subr.bf16.mxu0 0
    %1001 = vmatpush1.bf16.msra.mxu0 %v992
    %1002 = vmatprep.subr.bf16.mxu0 0
    %1003 = vmatpush1.bf16.msra.mxu0 0
    %1004 = vmatprep.subr.bf16.mxu0 0
    %1005 = vmatpush1.bf16.msra.mxu0 0
    %1006 = vmatprep.subr.bf16.mxu0 0
    %1007 = vmatpush1.bf16.msra.mxu0 0
    %1008 = vmatprep.subr.bf16.mxu0 0
    %1009 = vmatpush1.bf16.msra.mxu0 0
    %1010 = vmatprep.subr.bf16.mxu0 0
    %1011 = vmatpush1.bf16.msra.mxu0 0
    %1012 = vmatprep.subr.bf16.mxu0 0
    %1013 = vmatpush1.bf16.msra.mxu0 0
    %1014 = vmatprep.subr.bf16.mxu0 0
    %1015 = vmatpush1.bf16.msra.mxu0 0
    %1016 = vmatprep.subr.bf16.mxu0 0
    %1017 = vmatpush1.bf16.msra.mxu0 0
    %1018 = vmatprep.subr.bf16.mxu0 0
    %1019 = vmatpush1.bf16.msra.mxu0 0
    %1020 = vmatprep.subr.bf16.mxu0 0
    %1021 = vmatpush1.bf16.msra.mxu0 0
    %1022 = vmatprep.subr.bf16.mxu0 0
    %1023 = vmatpush1.bf16.msra.mxu0 0
    %1024 = vmatprep.subr.bf16.mxu0 0
    %1025 = vmatpush1.bf16.msra.mxu0 0
    %1026 = vmatprep.subr.bf16.mxu0 0
    %1027 = vmatpush1.bf16.msra.mxu0 0
    %1028 = vmatprep.subr.bf16.mxu0 0
    %1029 = vmatpush1.bf16.msra.mxu0 0
    %1030 = vmatprep.mubr.bf16.mxu0 0
    %1031 = vmatmul.mubr.bf16.gmra.mrb[0].mxu0 %v996
    %v1032 = vpop.f32.mrb[0].mxu0
    %v1033 = vadd.f32 %v918, %v1032
    %v1034 = vpop.f32.mrb[0].mxu0
    %v1035 = vpop.f32.mrb[0].mxu0
    %v1036 = vpop.f32.mrb[0].mxu0
    %1037 = vdwg.mxu0
    %v1038 = vld [vmem:[%s45] sm:$0x1]
    %v1040 = vlaneseq
    %v1041 = vshrl.u32 %v1040, 7
    %v1042 = vsub.s32 0, %v1041
    %v1043 = vrot.slane %v1038, %v1042
    %v1045 = vadd.f32 %v1033, %v1043
    %v1046 = vxor.u32 %v1045, 2147483648
    %v1047 = vmul.f32 %v1046, 1.442695
    %v1048 = vpow.pop %v1047
    %v1049 = vadd.f32 %v1048, 1.0
    %v1050 = vrcp.pop %v1049
    %v1051 = vmul.f32 1.0, %v1050
    %v1056 = vunpack.c.l.b16 %v856
    %v1057 = vunpack.c.l.b16 %v857
    %v1058 = vunpack.c.l.b16 %v858
    %v1059 = vunpack.c.l.b16 %v859
    %v1060 = vpack.c.b16 %v1057, %v1056
    %v1061 = vpack.c.b16 %v1059, %v1058
    %1064 = vmatprep.subr.bf16.mxu0 0
    %1065 = vmatpush1.bf16.msra.mxu0 %v1060
    %1066 = vmatprep.subr.bf16.mxu0 0
    %1067 = vmatpush1.bf16.msra.mxu0 %v1061
    %1068 = vmatprep.subr.bf16.mxu0 0
    %1069 = vmatpush1.bf16.msra.mxu0 0
    %1070 = vmatprep.subr.bf16.mxu0 0
    %1071 = vmatpush1.bf16.msra.mxu0 0
    %1072 = vmatprep.subr.bf16.mxu0 0
    %1073 = vmatpush1.bf16.msra.mxu0 0
    %1074 = vmatprep.subr.bf16.mxu0 0
    %1075 = vmatpush1.bf16.msra.mxu0 0
    %1076 = vmatprep.subr.bf16.mxu0 0
    %1077 = vmatpush1.bf16.msra.mxu0 0
    %1078 = vmatprep.subr.bf16.mxu0 0
    %1079 = vmatpush1.bf16.msra.mxu0 0
    %1080 = vmatprep.subr.bf16.mxu0 0
    %1081 = vmatpush1.bf16.msra.mxu0 0
    %1082 = vmatprep.subr.bf16.mxu0 0
    %1083 = vmatpush1.bf16.msra.mxu0 0
    %1084 = vmatprep.subr.bf16.mxu0 0
    %1085 = vmatpush1.bf16.msra.mxu0 0
    %1086 = vmatprep.subr.bf16.mxu0 0
    %1087 = vmatpush1.bf16.msra.mxu0 0
    %1088 = vmatprep.subr.bf16.mxu0 0
    %1089 = vmatpush1.bf16.msra.mxu0 0
    %1090 = vmatprep.subr.bf16.mxu0 0
    %1091 = vmatpush1.bf16.msra.mxu0 0
    %1092 = vmatprep.subr.bf16.mxu0 0
    %1093 = vmatpush1.bf16.msra.mxu0 0
    %1094 = vmatprep.subr.bf16.mxu0 0
    %1095 = vmatpush1.bf16.msra.mxu0 0
    %1096 = vmatprep.mubr.bf16.mxu0 0
    %1097 = vmatmul.mubr.bf16.gmra.mrb[0].mxu0 %v996
    %v1098 = vpop.f32.mrb[0].mxu0
    %v1099 = vadd.f32 %v974, %v1098
    %v1100 = vpop.f32.mrb[0].mxu0
    %v1101 = vpop.f32.mrb[0].mxu0
    %v1102 = vpop.f32.mrb[0].mxu0
    %1103 = vdwg.mxu0
    %v1104 = vld [vmem:[#allocation17] sm:$0x1]
    %v1106 = vlaneseq
    %v1107 = vshrl.u32 %v1106, 7
    %v1108 = vsub.s32 0, %v1107
    %v1109 = vrot.slane %v1104, %v1108
    %v1111 = vadd.f32 %v1099, %v1109
    %v1112 = vxor.u32 %v1111, 2147483648
    %v1113 = vmul.f32 %v1112, 1.442695
    %v1114 = vpow.pop %v1113
    %v1115 = vadd.f32 %v1114, 1.0
    %v1116 = vrcp.pop %v1115
    %v1117 = vmul.f32 1.0, %v1116
    %v1118 = vld [vmem:[#allocation19] sm:$0x1]
    %v1120 = vlaneseq
    %v1121 = vshrl.u32 %v1120, 7
    %v1122 = vsub.s32 0, %v1121
    %v1123 = vrot.slane %v1118, %v1122
    %v1129 = vunpack.c.l.b16 %v860
    %v1130 = vunpack.c.l.b16 %v861
    %v1131 = vunpack.c.l.b16 %v862
    %v1132 = vunpack.c.l.b16 %v863
    %v1133 = vpack.c.b16 %v1130, %v1129
    %v1134 = vpack.c.b16 %v1132, %v1131
    %1137 = vmatprep.subr.bf16.mxu0 0
    %1138 = vmatpush1.bf16.msra.mxu0 %v1133
    %1139 = vmatprep.subr.bf16.mxu0 0
    %1140 = vmatpush1.bf16.msra.mxu0 %v1134
    %1141 = vmatprep.subr.bf16.mxu0 0
    %1142 = vmatpush1.bf16.msra.mxu0 0
    %1143 = vmatprep.subr.bf16.mxu0 0
    %1144 = vmatpush1.bf16.msra.mxu0 0
    %1145 = vmatprep.subr.bf16.mxu0 0
    %1146 = vmatpush1.bf16.msra.mxu0 0
    %1147 = vmatprep.subr.bf16.mxu0 0
    %1148 = vmatpush1.bf16.msra.mxu0 0
    %1149 = vmatprep.subr.bf16.mxu0 0
    %1150 = vmatpush1.bf16.msra.mxu0 0
    %1151 = vmatprep.subr.bf16.mxu0 0
    %1152 = vmatpush1.bf16.msra.mxu0 0
    %1153 = vmatprep.subr.bf16.mxu0 0
    %1154 = vmatpush1.bf16.msra.mxu0 0
    %1155 = vmatprep.subr.bf16.mxu0 0
    %1156 = vmatpush1.bf16.msra.mxu0 0
    %1157 = vmatprep.subr.bf16.mxu0 0
    %1158 = vmatpush1.bf16.msra.mxu0 0
    %1159 = vmatprep.subr.bf16.mxu0 0
    %1160 = vmatpush1.bf16.msra.mxu0 0
    %1161 = vmatprep.subr.bf16.mxu0 0
    %1162 = vmatpush1.bf16.msra.mxu0 0
    %1163 = vmatprep.subr.bf16.mxu0 0
    %1164 = vmatpush1.bf16.msra.mxu0 0
    %1165 = vmatprep.subr.bf16.mxu0 0
    %1166 = vmatpush1.bf16.msra.mxu0 0
    %1167 = vmatprep.subr.bf16.mxu0 0
    %1168 = vmatpush1.bf16.msra.mxu0 0
    %1169 = vmatprep.mubr.bf16.mxu0 0
    %1170 = vmatmul.mubr.bf16.gmra.mrb[0].mxu0 %v996
    %v1171 = vpop.f32.mrb[0].mxu0
    %v1172 = vadd.f32 %v1123, %v1171
    %v1173 = vpop.f32.mrb[0].mxu0
    %v1174 = vpop.f32.mrb[0].mxu0
    %v1175 = vpop.f32.mrb[0].mxu0
    %1176 = vdwg.mxu0
    %v1177 = vld [vmem:[#allocation20] sm:$0x1]
    %v1179 = vlaneseq
    %v1180 = vshrl.u32 %v1179, 7
    %v1181 = vsub.s32 0, %v1180
    %v1182 = vrot.slane %v1177, %v1181
    %v1188 = vunpack.c.l.b16 %v979
    %v1189 = vunpack.c.l.b16 %v980
    %v1190 = vunpack.c.l.b16 %v981
    %v1191 = vunpack.c.l.b16 %v982
    %v1192 = vpack.c.b16 %v1189, %v1188
    %v1193 = vpack.c.b16 %v1191, %v1190
    %1196 = vmatprep.subr.bf16.mxu0 0
    %1197 = vmatpush1.bf16.msra.mxu0 %v1192
    %1198 = vmatprep.subr.bf16.mxu0 0
    %1199 = vmatpush1.bf16.msra.mxu0 %v1193
    %1200 = vmatprep.subr.bf16.mxu0 0
    %1201 = vmatpush1.bf16.msra.mxu0 0
    %1202 = vmatprep.subr.bf16.mxu0 0
    %1203 = vmatpush1.bf16.msra.mxu0 0
    %1204 = vmatprep.subr.bf16.mxu0 0
    %1205 = vmatpush1.bf16.msra.mxu0 0
    %1206 = vmatprep.subr.bf16.mxu0 0
    %1207 = vmatpush1.bf16.msra.mxu0 0
    %1208 = vmatprep.subr.bf16.mxu0 0
    %1209 = vmatpush1.bf16.msra.mxu0 0
    %1210 = vmatprep.subr.bf16.mxu0 0
    %1211 = vmatpush1.bf16.msra.mxu0 0
    %1212 = vmatprep.subr.bf16.mxu0 0
    %1213 = vmatpush1.bf16.msra.mxu0 0
    %1214 = vmatprep.subr.bf16.mxu0 0
    %1215 = vmatpush1.bf16.msra.mxu0 0
    %1216 = vmatprep.subr.bf16.mxu0 0
    %1217 = vmatpush1.bf16.msra.mxu0 0
    %1218 = vmatprep.subr.bf16.mxu0 0
    %1219 = vmatpush1.bf16.msra.mxu0 0
    %1220 = vmatprep.subr.bf16.mxu0 0
    %1221 = vmatpush1.bf16.msra.mxu0 0
    %1222 = vmatprep.subr.bf16.mxu0 0
    %1223 = vmatpush1.bf16.msra.mxu0 0
    %1224 = vmatprep.subr.bf16.mxu0 0
    %1225 = vmatpush1.bf16.msra.mxu0 0
    %1226 = vmatprep.subr.bf16.mxu0 0
    %1227 = vmatpush1.bf16.msra.mxu0 0
    %1228 = vmatprep.mubr.bf16.mxu0 0
    %1229 = vmatmul.mubr.bf16.gmra.mrb[0].mxu0 %v881
    %v1230 = vpop.f32.mrb[0].mxu0
    %v1231 = vadd.f32 %v1182, %v1230
    %v1232 = vpop.f32.mrb[0].mxu0
    %v1233 = vpop.f32.mrb[0].mxu0
    %v1234 = vpop.f32.mrb[0].mxu0
    %1235 = vdwg.mxu0
    %v1236 = vmul.f32 %v1051, %v1231
    %v1237 = vadd.f32 %v1172, %v1236
    %v1238 = vtanh.pop %v1237
    %v1239 = vsub.f32 1.0, %v1117
    %v1240 = vmul.f32 %v1239, %v1238
    %v1241 = vmul.f32 %v1117, %v850
    %v1242 = vadd.f32 %v1240, %v1241
    %s1243 = scalar_lea.vmem [#allocation26], 2
    %1244 = vst.msk [vmem:[%s1243] sm:$0x3] %vm846, %v1242
    %v1245 = vpack.c.bf16 %v1242, %v1242
    %v1246 = vld [vmem:[#allocation22] sm:$0x3]
    %v1247 = vld [vmem:[%s55] sm:$0xf]
    %v1248 = vld [vmem:[%s55 + $0x4] sm:$0xf]
    %v1249 = vld [vmem:[%s55 + $0x8] sm:$0xf]
    %v1250 = vld [vmem:[%s55 + $0xc] sm:$0xf]
    %v1255 = vunpack.c.l.b16 %v1247
    %v1256 = vunpack.c.l.b16 %v1248
    %v1257 = vunpack.c.l.b16 %v1249
    %v1258 = vunpack.c.l.b16 %v1250
    %v1259 = vpack.c.b16 %v1256, %v1255
    %v1260 = vpack.c.b16 %v1258, %v1257
    %1263 = vmatprep.subr.bf16.mxu0 0
    %1264 = vmatpush1.bf16.msra.mxu0 %v1259
    %1265 = vmatprep.subr.bf16.mxu0 0
    %1266 = vmatpush1.bf16.msra.mxu0 %v1260
    %1267 = vmatprep.subr.bf16.mxu0 0
    %1268 = vmatpush1.bf16.msra.mxu0 0
    %1269 = vmatprep.subr.bf16.mxu0 0
    %1270 = vmatpush1.bf16.msra.mxu0 0
    %1271 = vmatprep.subr.bf16.mxu0 0
    %1272 = vmatpush1.bf16.msra.mxu0 0
    %1273 = vmatprep.subr.bf16.mxu0 0
    %1274 = vmatpush1.bf16.msra.mxu0 0
    %1275 = vmatprep.subr.bf16.mxu0 0
    %1276 = vmatpush1.bf16.msra.mxu0 0
    %1277 = vmatprep.subr.bf16.mxu0 0
    %1278 = vmatpush1.bf16.msra.mxu0 0
    %1279 = vmatprep.subr.bf16.mxu0 0
    %1280 = vmatpush1.bf16.msra.mxu0 0
    %1281 = vmatprep.subr.bf16.mxu0 0
    %1282 = vmatpush1.bf16.msra.mxu0 0
    %1283 = vmatprep.subr.bf16.mxu0 0
    %1284 = vmatpush1.bf16.msra.mxu0 0
    %1285 = vmatprep.subr.bf16.mxu0 0
    %1286 = vmatpush1.bf16.msra.mxu0 0
    %1287 = vmatprep.subr.bf16.mxu0 0
    %1288 = vmatpush1.bf16.msra.mxu0 0
    %1289 = vmatprep.subr.bf16.mxu0 0
    %1290 = vmatpush1.bf16.msra.mxu0 0
    %1291 = vmatprep.subr.bf16.mxu0 0
    %1292 = vmatpush1.bf16.msra.mxu0 0
    %1293 = vmatprep.subr.bf16.mxu0 0
    %1294 = vmatpush1.bf16.msra.mxu0 0
    %1295 = vmatprep.mubr.bf16.mxu0 0
    %1296 = vmatmul.mubr.bf16.gmra.mrb[0].mxu0 %v333
    %v1297 = vpop.f32.mrb[0].mxu0
    %v1298 = vadd.f32 0.0, %v1297
    %v1299 = vpop.f32.mrb[0].mxu0
    %v1300 = vpop.f32.mrb[0].mxu0
    %v1301 = vpop.f32.mrb[0].mxu0
    %1302 = vdwg.mxu0
    %v1304 = vsel %vm379, %v1246, 0
    %1306 = vmatprep.subr.bf16.mxu0 0
    %1307 = vmatpush1.bf16.msra.mxu0 %v1304
    %1308 = vmatprep.subr.bf16.mxu0 0
    %1309 = vmatpush1.bf16.msra.mxu0 0
    %1310 = vmatprep.subr.bf16.mxu0 0
    %1311 = vmatpush1.bf16.msra.mxu0 0
    %1312 = vmatprep.subr.bf16.mxu0 0
    %1313 = vmatpush1.bf16.msra.mxu0 0
    %1314 = vmatprep.subr.bf16.mxu0 0
    %1315 = vmatpush1.bf16.msra.mxu0 0
    %1316 = vmatprep.subr.bf16.mxu0 0
    %1317 = vmatpush1.bf16.msra.mxu0 0
    %1318 = vmatprep.subr.bf16.mxu0 0
    %1319 = vmatpush1.bf16.msra.mxu0 0
    %1320 = vmatprep.subr.bf16.mxu0 0
    %1321 = vmatpush1.bf16.msra.mxu0 0
    %1322 = vmatprep.subr.bf16.mxu0 0
    %1323 = vmatpush1.bf16.msra.mxu0 0
    %1324 = vmatprep.subr.bf16.mxu0 0
    %1325 = vmatpush1.bf16.msra.mxu0 0
    %1326 = vmatprep.subr.bf16.mxu0 0
    %1327 = vmatpush1.bf16.msra.mxu0 0
    %1328 = vmatprep.subr.bf16.mxu0 0
    %1329 = vmatpush1.bf16.msra.mxu0 0
    %1330 = vmatprep.subr.bf16.mxu0 0
    %1331 = vmatpush1.bf16.msra.mxu0 0
    %1332 = vmatprep.subr.bf16.mxu0 0
    %1333 = vmatpush1.bf16.msra.mxu0 0
    %1334 = vmatprep.subr.bf16.mxu0 0
    %1335 = vmatpush1.bf16.msra.mxu0 0
    %1336 = vmatprep.subr.bf16.mxu0 0
    %1337 = vmatpush1.bf16.msra.mxu0 0
    %1338 = vmatprep.mubr.bf16.mxu0 0
    %1339 = vmatmul.mubr.bf16.gmra.mrb[0].mxu0 %v377
    %v1340 = vpop.f32.mrb[0].mxu0
    %v1341 = vadd.f32 %v1298, %v1340
    %v1342 = vpop.f32.mrb[0].mxu0
    %v1343 = vpop.f32.mrb[0].mxu0
    %v1344 = vpop.f32.mrb[0].mxu0
    %1345 = vdwg.mxu0
    %v1346 = vld [vmem:[%s57] sm:$0xf]
    %v1347 = vld [vmem:[%s57 + $0x4] sm:$0xf]
    %v1348 = vld [vmem:[%s57 + $0x8] sm:$0xf]
    %v1349 = vld [vmem:[%s57 + $0xc] sm:$0xf]
    %v1354 = vunpack.c.l.b16 %v1346
    %v1355 = vunpack.c.l.b16 %v1347
    %v1356 = vunpack.c.l.b16 %v1348
    %v1357 = vunpack.c.l.b16 %v1349
    %v1358 = vpack.c.b16 %v1355, %v1354
    %v1359 = vpack.c.b16 %v1357, %v1356
    %v1363 = vsel %vm331, %v1245, 0
    %1365 = vmatprep.subr.bf16.mxu0 0
    %1366 = vmatpush1.bf16.msra.mxu0 %v1358
    %1367 = vmatprep.subr.bf16.mxu0 0
    %1368 = vmatpush1.bf16.msra.mxu0 %v1359
    %1369 = vmatprep.subr.bf16.mxu0 0
    %1370 = vmatpush1.bf16.msra.mxu0 0
    %1371 = vmatprep.subr.bf16.mxu0 0
    %1372 = vmatpush1.bf16.msra.mxu0 0
    %1373 = vmatprep.subr.bf16.mxu0 0
    %1374 = vmatpush1.bf16.msra.mxu0 0
    %1375 = vmatprep.subr.bf16.mxu0 0
    %1376 = vmatpush1.bf16.msra.mxu0 0
    %1377 = vmatprep.subr.bf16.mxu0 0
    %1378 = vmatpush1.bf16.msra.mxu0 0
    %1379 = vmatprep.subr.bf16.mxu0 0
    %1380 = vmatpush1.bf16.msra.mxu0 0
    %1381 = vmatprep.subr.bf16.mxu0 0
    %1382 = vmatpush1.bf16.msra.mxu0 0
    %1383 = vmatprep.subr.bf16.mxu0 0
    %1384 = vmatpush1.bf16.msra.mxu0 0
    %1385 = vmatprep.subr.bf16.mxu0 0
    %1386 = vmatpush1.bf16.msra.mxu0 0
    %1387 = vmatprep.subr.bf16.mxu0 0
    %1388 = vmatpush1.bf16.msra.mxu0 0
    %1389 = vmatprep.subr.bf16.mxu0 0
    %1390 = vmatpush1.bf16.msra.mxu0 0
    %1391 = vmatprep.subr.bf16.mxu0 0
    %1392 = vmatpush1.bf16.msra.mxu0 0
    %1393 = vmatprep.subr.bf16.mxu0 0
    %1394 = vmatpush1.bf16.msra.mxu0 0
    %1395 = vmatprep.subr.bf16.mxu0 0
    %1396 = vmatpush1.bf16.msra.mxu0 0
    %1397 = vmatprep.mubr.bf16.mxu0 0
    %1398 = vmatmul.mubr.bf16.gmra.mrb[0].mxu0 %v1363
    %v1399 = vpop.f32.mrb[0].mxu0
    %v1400 = vadd.f32 0.0, %v1399
    %v1401 = vpop.f32.mrb[0].mxu0
    %v1402 = vpop.f32.mrb[0].mxu0
    %v1403 = vpop.f32.mrb[0].mxu0
    %1404 = vdwg.mxu0
    %v1405 = vadd.f32 %v1341, %v1400
    %v1406 = vld [vmem:[#allocation23] sm:$0x1]
    %v1408 = vlaneseq
    %v1409 = vshrl.u32 %v1408, 7
    %v1410 = vsub.s32 0, %v1409
    %v1411 = vrot.slane %v1406, %v1410
    %v1413 = vadd.f32 %v1405, %v1411
    %vm1414 = vcmask 58368
    %1415 = vst.msk [vmem:[#allocation25] sm:$0x3] %vm1414, %v1413
    // Predicated region
    $region178: #{decoder_rnn_forward.1} parent=1 // pred_check
      _
    $region179: #{decoder_rnn_forward.1} parent=1 // pred_check_branch
      %1417 = sbr.rel (0) target = $region181
    $region180: #{decoder_rnn_forward.1} parent=1 // pred_region
      %s1419 = ssub.s32 32, 32
      %1420 = vsyncadd [#allocation4], %s1419
      %s1422 = sshll.u32 [#allocation25], 4
      %s1423 = int_to_ptr.vmem [resolvable:$true] %s1422
      %1425 = dma.vmem_to_hbm [thread:$0]  %s1423, 32, %s61, [#allocation4]
    $region181: #{decoder_rnn_forward.1} parent=1 // pred_fallthru
      _
    // Predicated region
    $region182: #{decoder_rnn_forward.1} parent=1 // pred_check
      _
    $region183: #{decoder_rnn_forward.1} parent=1 // pred_check_branch
      %1427 = sbr.rel (0) target = $region185
    $region184: #{decoder_rnn_forward.1} parent=1 // pred_region
      %s1429 = ssub.s32 64, 64
      %1430 = vsyncadd [#allocation27], %s1429
      %s1431 = sshll.u32 [#allocation26], 4
      %s1432 = int_to_ptr.vmem [resolvable:$true] %s1431
      %1437 = dma.vmem_to_hbm [thread:$0]  %s1432, 64, %s63, [#allocation27], 32, 32, 2
    $region185: #{decoder_rnn_forward.1} parent=1 // pred_fallthru
      _
    // Predicated region
    $region186: #{decoder_rnn_forward.1} parent=1 // pred_check
      _
    $region187: #{decoder_rnn_forward.1} parent=1 // pred_check_branch
      %1439 = sbr.rel (0) target = $region189
    $region188: #{decoder_rnn_forward.1} parent=1 // pred_region
      %1440 = dma.done [#allocation4], 32
    $region189: #{decoder_rnn_forward.1} parent=1 // pred_fallthru
      _
    // Predicated region
    $region190: #{decoder_rnn_forward.1} parent=1 // pred_check
      _
    $region191: #{decoder_rnn_forward.1} parent=1 // pred_check_branch
      %1442 = sbr.rel (0) target = $region193
    $region192: #{decoder_rnn_forward.1} parent=1 // pred_region
      %1443 = dma.done [#allocation27], 64
    $region193: #{decoder_rnn_forward.1} parent=1 // pred_fallthru
      _
    %1444 = vsyncpa [#allocation3], 1
    %1445 = vsyncpa [#allocation6], 1
    %1446 = vsyncpa [#allocation9], 1
    %1447 = vsyncpa [#allocation12], 1
    %1448 = vsyncpa [#allocation15], 1
    %1449 = vsyncpa [#allocation18], 1
    %1450 = vsyncpa [#allocation21], 1
    %1451 = vsyncpa [#allocation24], 1
    %1452 = vsyncpa [#allocation4], 1
    %1453 = vsyncpa [#allocation27], 1

</llo_original>
